<compile_context>
chip_gen: v5e
topology: v5e:2x2
jax: 0.10.0
libtpu: 0.0.40
codegen_flags: <defaults>
</compile_context>

<pallas_src>
import math
import functools

import jax
import jax.numpy as jnp
import numpy as np
from jax.experimental import pallas as pl
from jax.experimental.pallas import tpu as pltpu

_INV_SQRT2 = 1.0 / math.sqrt(2.0)

_PARAM_ORDER = ("wqkv", "bqkv", "wo", "bo", "g1", "be1",
                "wi", "bi", "w2", "bo2", "g2", "be2")
# Matmul weights feed the MXU -> stored in bf16 (accumulation stays f32).
_MXU_WEIGHTS = frozenset({"wqkv", "wo", "wi", "w2"})


# ---------------------------------------------------------------------------
# Pallas kernel: one BertLayer, one (batch, query-tile) grid cell.
# ---------------------------------------------------------------------------
def bert_layer_kernel(
    x_ref, mask_ref,
    wqkv_ref, bqkv_ref,
    wo_ref, bo_ref, g1_ref, be1_ref,
    wi_ref, bi_ref, w2_ref, bo2_ref, g2_ref, be2_ref,
    out_ref,
    q_scr, k_scr, v_scr,
    *, num_heads, head_dim, q_tile, num_q_tiles, eps,
):
    S = x_ref.shape[1]
    H = num_heads * head_dim
    t = pl.program_id(1)

    # --- Once per batch element (t == 0): fused QKV projection for the FULL
    # sequence.  Cast to bf16 BEFORE the head relayout; one reshape + einshape
    # per tensor; park in bf16 VMEM scratch for reuse by later query tiles.
    @pl.when(t == 0)
    def _():
        x_full = x_ref[0].astype(jnp.bfloat16)                      # (S, H)
        qkv = (jnp.dot(x_full, wqkv_ref[...],
                       preferred_element_type=jnp.float32)
               + bqkv_ref[...].astype(jnp.float32))                 # (S, 3H) f32
        qkv = qkv.astype(jnp.bfloat16)

        def to_heads(m):                                            # (S,H)->(nh,S,dh)
            return pltpu.einshape("shd->hsd",
                                  m.reshape(S, num_heads, head_dim))

        # 1/sqrt(head_dim) is pre-folded into wq / bq on the host.
        q_scr[...] = to_heads(qkv[:, :H])
        k_scr[...] = to_heads(qkv[:, H:2 * H])
        v_scr[...] = to_heads(qkv[:, 2 * H:])

    if num_q_tiles == 1:
        q0 = 0                                       # static slice for tiny configs
    else:
        q0 = pl.multiple_of(t * q_tile, q_tile)

    x_tile = x_ref[0, pl.ds(q0, q_tile), :].astype(jnp.float32)     # (TQ, H) residual
    mask = mask_ref[...].astype(jnp.float32)                        # (1, 1, S)

    q3 = q_scr[:, pl.ds(q0, q_tile), :]                             # (nh, TQ, dh) bf16
    k3 = k_scr[...]                                                 # (nh, S,  dh) bf16
    v3 = v_scr[...]                                                 # (nh, S,  dh) bf16

    # ----- attention: all heads through one batched MXU stream each -----
    scores = jnp.einsum("hqd,hkd->hqk", q3, k3,
                        preferred_element_type=jnp.float32)          # (nh, TQ, S)
    scores = scores + mask                                           # broadcast add
    scores = scores - jnp.max(scores, axis=-1, keepdims=True)
    e = jnp.exp(scores)
    # NOTE: approx reciprocal -> attention rows sum to 1 only to ~1e-3 relative.
    probs = e * pl.reciprocal(jnp.sum(e, axis=-1, keepdims=True), approx=True)
    # TODO(synk): attention-probs dropout is identity (eval-mode forward).

    ctx = jnp.einsum("hqk,hkd->hqd", probs.astype(jnp.bfloat16), v3,
                     preferred_element_type=jnp.float32)             # (nh, TQ, dh)
    context = pltpu.einshape("hqd->qhd",
                             ctx.astype(jnp.bfloat16)).reshape(q_tile, H)

    def linear(inp_bf16, w_ref, b_ref):
        # bf16 MXU operands, f32 accumulation, f32 bias add.
        return (jnp.dot(inp_bf16, w_ref[...],
                        preferred_element_type=jnp.float32)
                + b_ref[...].astype(jnp.float32))

    def layer_norm(y, g_ref, b_ref):
        u = jnp.mean(y, axis=-1, keepdims=True)
        var = jnp.mean((y - u) ** 2, axis=-1, keepdims=True)
        yn = (y - u) * jax.lax.rsqrt(var + eps)                      # rsqrt -> EUP
        return yn * g_ref[...].astype(jnp.float32) + b_ref[...].astype(jnp.float32)

    # ----- BertSelfOutput: dense + residual + LayerNorm (dropout = identity) -----
    attn_out = layer_norm(linear(context, wo_ref, bo_ref) + x_tile, g1_ref, be1_ref)

    # ----- BertIntermediate: dense + exact-erf GELU (matches torch gelu) -----
    inter = linear(attn_out.astype(jnp.bfloat16), wi_ref, bi_ref)    # (TQ, I)
    inter = inter * 0.5 * (1.0 + jax.lax.erf(inter * _INV_SQRT2))

    # ----- BertOutput: dense + residual + LayerNorm (dropout = identity) -----
    layer_out = layer_norm(linear(inter.astype(jnp.bfloat16), w2_ref, bo2_ref)
                           + attn_out, g2_ref, be2_ref)

    out_ref[...] = layer_out[None].astype(out_ref.dtype)


# ---------------------------------------------------------------------------
# Wrapper helpers.
# ---------------------------------------------------------------------------
_SINGLE_BUFFER_SUPPORTED = None


def _single_buffer_supported():
    """One-time compile probe for pl.Buffered(1) single-buffering support.

    The probe is a tiny, separate compile; the real pallas_call is never
    wrapped in a try/except, so genuine compile/runtime errors surface.
    """
    global _SINGLE_BUFFER_SUPPORTED
    if _SINGLE_BUFFER_SUPPORTED is not None:
        return _SINGLE_BUFFER_SUPPORTED

    def _copy(x_ref, o_ref):
        o_ref[...] = x_ref[...]

    try:
        probe = pl.pallas_call(
            _copy,
            grid=(1,),
            in_specs=[pl.BlockSpec((8, 128), lambda i: (0, 0),
                                   pipeline_mode=pl.Buffered(1))],
            out_specs=pl.BlockSpec((8, 128), lambda i: (0, 0)),
            out_shape=jax.ShapeDtypeStruct((8, 128), jnp.float32),
        )
        jax.jit(probe).lower(jnp.zeros((8, 128), jnp.float32)).compile()
        _SINGLE_BUFFER_SUPPORTED = True
    except Exception:  # narrow scope: probe only, never the real kernel
        _SINGLE_BUFFER_SUPPORTED = False
    return _SINGLE_BUFFER_SUPPORTED


def _physical_vmem_bytes():
    try:
        return int(pltpu.get_tpu_info().vmem_capacity_bytes)
    except Exception:  # narrow scope: hardware query only; 64 MiB is safe everywhere
        return 64 << 20


def _pick_query_tile(S):
    for tq in (256, 128):
        if S > tq and S % tq == 0:
            return tq
    return S


def _vmem_limit_bytes(flat_params, S, H, inter, num_heads, q_tile, weight_bufs):
    """Scoped-VMEM budget for the tiled layer, capped per chip generation."""
    weight_bytes = weight_bufs * sum(int(p.size) * p.dtype.itemsize
                                     for p in flat_params)
    act_elems = (
        2 * S * H                        # x block (double-buffered input), f32
        + 5 * S * H                      # full-seq QKV temps at t == 0
        + (3 * S * H) // 2               # q/k/v bf16 scratch (f32-element units)
        + 3 * num_heads * q_tile * S     # scores / exp / probs
        + 2 * q_tile * inter             # intermediate + GELU temp
        + 8 * q_tile * H                 # context / attn_out / layer_out / out block
    )
    needed = int(1.5 * (weight_bytes + 4 * act_elems)) + (8 << 20)
    cap = int(_physical_vmem_bytes() * 0.85)   # ~108 MiB on 128 MiB chips, ~54 MiB v7x
    return max(32 << 20, min(needed, cap))


def _prepare_layer_params(params, num_heads):
    """Fuse QKV, fold 1/sqrt(dh) into the Q weight/bias, cast MXU weights to bf16."""
    H = params["wq"].shape[0]
    head_dim = H // num_heads
    scale = 1.0 / math.sqrt(head_dim)
    fused = {
        "wqkv": jnp.concatenate([params["wq"] * scale, params["wk"], params["wv"]],
                                axis=1),
        "bqkv": jnp.concatenate([params["bq"] * scale, params["bk"], params["bv"]],
                                axis=1),
        "wo": params["wo"], "bo": params["bo"],
        "g1": params["g1"], "be1": params["be1"],
        "wi": params["wi"], "bi": params["bi"],
        "w2": params["w2"], "bo2": params["bo2"],
        "g2": params["g2"], "be2": params["be2"],
    }
    return [fused[k].astype(jnp.bfloat16 if k in _MXU_WEIGHTS else jnp.float32)
            for k in _PARAM_ORDER]


# ---------------------------------------------------------------------------
# One BertLayer.
# ---------------------------------------------------------------------------
def bert_layer_pallas(x, mask, params, *, num_heads, eps=1e-12):
    B, S, H = x.shape
    head_dim = H // num_heads
    inter_size = params["wi"].shape[1]
    q_tile = _pick_query_tile(S)
    num_q_tiles = S // q_tile

    flat_params = _prepare_layer_params(params, num_heads)
    single_buf = _single_buffer_supported()
    vmem_limit = _vmem_limit_bytes(flat_params, S, H, inter_size, num_heads,
                                   q_tile, weight_bufs=1 if single_buf else 2)

    def weight_spec(arr):
        # Grid-invariant block: fetched once; single-buffered when supported
        # (double-buffering it is pure VMEM waste).
        kwargs = {"pipeline_mode": pl.Buffered(1)} if single_buf else {}
        return pl.BlockSpec(arr.shape, lambda b, t: (0,) * arr.ndim, **kwargs)

    in_specs = [
        pl.BlockSpec((1, S, H), lambda b, t: (b, 0, 0)),   # hidden_states (full seq)
        pl.BlockSpec((1, 1, S), lambda b, t: (b, 0, 0)),   # additive attention mask
    ] + [weight_spec(p) for p in flat_params]
    out_specs = pl.BlockSpec((1, q_tile, H), lambda b, t: (b, t, 0))

    kernel = functools.partial(
        bert_layer_kernel, num_heads=num_heads, head_dim=head_dim,
        q_tile=q_tile, num_q_tiles=num_q_tiles, eps=eps)

    # TODO(synk): at B=1 on v7x only one TensorCore is used — the query-tile
    # axis stays "arbitrary" because K/V scratch is filled at t == 0 and reused
    # by later tiles; making it "parallel" would require per-tile K/V recompute.
    return pl.pallas_call(
        kernel,
        grid=(B, num_q_tiles),
        in_specs=in_specs,
        out_specs=out_specs,
        out_shape=jax.ShapeDtypeStruct((B, S, H), x.dtype),
        scratch_shapes=[
            pltpu.VMEM((num_heads, S, head_dim), jnp.bfloat16),  # Q
            pltpu.VMEM((num_heads, S, head_dim), jnp.bfloat16),  # K
            pltpu.VMEM((num_heads, S, head_dim), jnp.bfloat16),  # V
        ],
        compiler_params=pltpu.CompilerParams(
            dimension_semantics=("parallel", "arbitrary"),
            vmem_limit_bytes=vmem_limit,
        ),
    )(x, mask, *flat_params)


def bert_encoder_pallas(hidden_states, attention_mask, layer_params, *,
                        num_heads, output_all_encoded_layers=True):
    # TODO(synk): cross-layer weight prefetch (start layer l+1's weight DMA
    # inside layer l's call via cross-pallas_call DMA futures) is not
    # implemented; each layer's weight DMA is exposed at the head of its call.
    all_layers = []
    for params in layer_params:
        hidden_states = bert_layer_pallas(hidden_states, attention_mask, params,
                                          num_heads=num_heads)
        if output_all_encoded_layers:
            all_layers.append(hidden_states)
    if not output_all_encoded_layers:
        all_layers.append(hidden_states)
    return all_layers


# ---------------------------------------------------------------------------
# Pure-JAX f32 reference (mirrors the PyTorch forward, dropout = identity).
# ---------------------------------------------------------------------------
def bert_layer_ref(x, mask, p, *, num_heads, eps=1e-12):
    B, S, H = x.shape
    dh = H // num_heads

    def lin(inp, w, b):
        return inp @ w + b[0]

    def ln(y, g, be):
        u = jnp.mean(y, axis=-1, keepdims=True)
        s = jnp.mean((y - u) ** 2, axis=-1, keepdims=True)
        return (y - u) / jnp.sqrt(s + eps) * g[0] + be[0]

    def heads(t):
        return t.reshape(B, S, num_heads, dh).transpose(0, 2, 1, 3)

    q = heads(lin(x, p["wq"], p["bq"]))
    k = heads(lin(x, p["wk"], p["bk"]))
    v = heads(lin(x, p["wv"], p["bv"]))
    scores = jnp.einsum("bhqd,bhkd->bhqk", q, k) / math.sqrt(dh)
    scores = scores + mask[:, :, None, :]            # (B,1,1,S) broadcast
    probs = jax.nn.softmax(scores, axis=-1)
    ctx = jnp.einsum("bhqk,bhkd->bhqd", probs, v).transpose(0, 2, 1, 3).reshape(B, S, H)
    attn_out = ln(lin(ctx, p["wo"], p["bo"]) + x, p["g1"], p["be1"])
    inter = lin(attn_out, p["wi"], p["bi"])
    inter = inter * 0.5 * (1.0 + jax.lax.erf(inter / math.sqrt(2.0)))
    return ln(lin(inter, p["w2"], p["bo2"]) + attn_out, p["g2"], p["be2"])


# ---------------------------------------------------------------------------
# Deterministic parameter init (synthetic weights, no checkpoint load).
# ---------------------------------------------------------------------------
def init_layer_params(key, hidden, intermediate):
    ks = jax.random.split(key, 6)
    std = 0.02
    return {
        "wq": jax.random.normal(ks[0], (hidden, hidden), jnp.float32) * std,
        "bq": jnp.zeros((1, hidden), jnp.float32),
        "wk": jax.random.normal(ks[1], (hidden, hidden), jnp.float32) * std,
        "bk": jnp.zeros((1, hidden), jnp.float32),
        "wv": jax.random.normal(ks[2], (hidden, hidden), jnp.float32) * std,
        "bv": jnp.zeros((1, hidden), jnp.float32),
        "wo": jax.random.normal(ks[3], (hidden, hidden), jnp.float32) * std,
        "bo": jnp.zeros((1, hidden), jnp.float32),
        "g1": jnp.ones((1, hidden), jnp.float32),
        "be1": jnp.zeros((1, hidden), jnp.float32),
        "wi": jax.random.normal(ks[4], (hidden, intermediate), jnp.float32) * std,
        "bi": jnp.zeros((1, intermediate), jnp.float32),
        "w2": jax.random.normal(ks[5], (intermediate, hidden), jnp.float32) * std,
        "bo2": jnp.zeros((1, hidden), jnp.float32),
        "g2": jnp.ones((1, hidden), jnp.float32),
        "be2": jnp.zeros((1, hidden), jnp.float32),
    }


if __name__ == "__main__":
    # Small BERT config: batch=2, seq=8, hidden=32, heads=4, intermediate=64, layers=2.
    # (Production shapes -- H >= 768, S a multiple of 128 -- are the perf target;
    #  the toy config only exercises correctness.)
    B, S, H, NH, I, L = 2, 8, 32, 4, 64, 2

    key = jax.random.PRNGKey(0)
    k_x, k_p = jax.random.split(key)

    hidden_states = jax.random.normal(k_x, (B, S, H), jnp.float32)

    # Padding mask: second example has its last 2 positions masked out.
    pad = np.ones((B, S), np.float32)
    pad[1, -2:] = 0.0
    attention_mask = jnp.asarray((1.0 - pad) * -10000.0).reshape(B, 1, S)

    layer_keys = jax.random.split(k_p, L)
    layer_params = [init_layer_params(layer_keys[i], H, I) for i in range(L)]

    # TODO(synk): nn.Dropout layers are treated as identity (eval-mode forward).

    all_layers = bert_encoder_pallas(hidden_states, attention_mask, layer_params,
                                     num_heads=NH, output_all_encoded_layers=True)
    all_layers = [jax.block_until_ready(a) for a in all_layers]

    # Cross-check against the pure-JAX f32 reference.  Tolerance is loosened
    # because the Pallas kernel runs its matmuls with bf16 MXU operands
    # (f32 accumulation) and uses the approximate EUP reciprocal for softmax.
    h_ref = hidden_states
    for li in range(L):
        h_ref = bert_layer_ref(h_ref, attention_mask, layer_params[li], num_heads=NH)
        np.testing.assert_allclose(np.asarray(all_layers[li]), np.asarray(h_ref),
                                   rtol=2e-2, atol=2e-2)

    print("KERNEL_OK")
</pallas_src>

<mosaic_0001>
module attributes {stable_mosaic.version = 11 : i64} {
  func.func @bert_layer_kernel(%arg0: i32, %arg1: i32, %arg2: memref<1x8x32xf32, #tpu.memory_space<vmem>>, %arg3: memref<1x1x8xf32, #tpu.memory_space<vmem>>, %arg4: memref<32x96xbf16, #tpu.memory_space<vmem>>, %arg5: memref<1x96xf32, #tpu.memory_space<vmem>>, %arg6: memref<32x32xbf16, #tpu.memory_space<vmem>>, %arg7: memref<1x32xf32, #tpu.memory_space<vmem>>, %arg8: memref<1x32xf32, #tpu.memory_space<vmem>>, %arg9: memref<1x32xf32, #tpu.memory_space<vmem>>, %arg10: memref<32x64xbf16, #tpu.memory_space<vmem>>, %arg11: memref<1x64xf32, #tpu.memory_space<vmem>>, %arg12: memref<64x32xbf16, #tpu.memory_space<vmem>>, %arg13: memref<1x32xf32, #tpu.memory_space<vmem>>, %arg14: memref<1x32xf32, #tpu.memory_space<vmem>>, %arg15: memref<1x32xf32, #tpu.memory_space<vmem>>, %arg16: memref<1x8x32xf32, #tpu.memory_space<vmem>>, %arg17: memref<4x8x8xbf16, #tpu.memory_space<vmem>>, %arg18: memref<4x8x8xbf16, #tpu.memory_space<vmem>>, %arg19: memref<4x8x8xbf16, #tpu.memory_space<vmem>>) attributes {dimension_semantics = [#tpu.dimension_semantics<parallel>, #tpu.dimension_semantics<arbitrary>], iteration_bounds = array<i64: 2, 1>, scalar_prefetch = 0 : i64, scratch_operands = 3 : i64, tpu.core_type = #tpu.core_type<tc>, window_params = [{transform_indices = @transform_0, window_bounds = array<i64: 1, 8, 32>}, {transform_indices = @transform_1, window_bounds = array<i64: 1, 1, 8>}, {pipeline_mode = #tpu.pipeline_mode<synchronous>, transform_indices = @transform_2, window_bounds = array<i64: 32, 96>}, {pipeline_mode = #tpu.pipeline_mode<synchronous>, transform_indices = @transform_3, window_bounds = array<i64: 1, 96>}, {pipeline_mode = #tpu.pipeline_mode<synchronous>, transform_indices = @transform_4, window_bounds = array<i64: 32, 32>}, {pipeline_mode = #tpu.pipeline_mode<synchronous>, transform_indices = @transform_5, window_bounds = array<i64: 1, 32>}, {pipeline_mode = #tpu.pipeline_mode<synchronous>, transform_indices = @transform_6, window_bounds = array<i64: 1, 32>}, {pipeline_mode = #tpu.pipeline_mode<synchronous>, transform_indices = @transform_7, window_bounds = array<i64: 1, 32>}, {pipeline_mode = #tpu.pipeline_mode<synchronous>, transform_indices = @transform_8, window_bounds = array<i64: 32, 64>}, {pipeline_mode = #tpu.pipeline_mode<synchronous>, transform_indices = @transform_9, window_bounds = array<i64: 1, 64>}, {pipeline_mode = #tpu.pipeline_mode<synchronous>, transform_indices = @transform_10, window_bounds = array<i64: 64, 32>}, {pipeline_mode = #tpu.pipeline_mode<synchronous>, transform_indices = @transform_11, window_bounds = array<i64: 1, 32>}, {pipeline_mode = #tpu.pipeline_mode<synchronous>, transform_indices = @transform_12, window_bounds = array<i64: 1, 32>}, {pipeline_mode = #tpu.pipeline_mode<synchronous>, transform_indices = @transform_13, window_bounds = array<i64: 1, 32>}, {transform_indices = @transform_14, window_bounds = array<i64: 1, 8, 32>}]} {
    %c0_i32 = arith.constant 0 : i32
    %0 = arith.cmpi eq, %arg1, %c0_i32 : i32
    %1 = arith.extui %0 : i1 to i32
    %c0_i32_0 = arith.constant 0 : i32
    %2 = arith.cmpi ne, %1, %c0_i32_0 : i32
    scf.if %2 {
      %c0_57 = arith.constant 0 : index
      %c0_58 = arith.constant 0 : index
      %c0_59 = arith.constant 0 : index
      %104 = vector.load %arg2[%c0_57, %c0_58, %c0_59] : memref<1x8x32xf32, #tpu.memory_space<vmem>>, vector<1x8x32xf32>
      %105 = vector.shape_cast %104 : vector<1x8x32xf32> to vector<8x32xf32>
      %106 = arith.truncf %105 : vector<8x32xf32> to vector<8x32xbf16>
      %c0_60 = arith.constant 0 : index
      %c0_61 = arith.constant 0 : index
      %107 = vector.load %arg4[%c0_60, %c0_61] : memref<32x96xbf16, #tpu.memory_space<vmem>>, vector<32x96xbf16>
      %cst_62 = arith.constant dense<0.000000e+00> : vector<8x96xf32>
      %108 = tpu.matmul %106, %107, %cst_62 {dimension_numbers = #tpu.dot_dimension_numbers<[1], [0], [0], [1], [0, 0, 1, 1], [], []>} : vector<8x32xbf16>, vector<32x96xbf16>, vector<8x96xf32> -> vector<8x96xf32>
      %c0_63 = arith.constant 0 : index
      %c0_64 = arith.constant 0 : index
      %109 = vector.load %arg5[%c0_63, %c0_64] : memref<1x96xf32, #tpu.memory_space<vmem>>, vector<1x96xf32>
      %110 = vector.broadcast %109 : vector<1x96xf32> to vector<8x96xf32>
      %111 = arith.addf %108, %110 : vector<8x96xf32>
      %112 = arith.truncf %111 : vector<8x96xf32> to vector<8x96xbf16>
      %113 = vector.extract_strided_slice %112 {offsets = [0, 0], sizes = [8, 32], strides = [1, 1]} : vector<8x96xbf16> to vector<8x32xbf16>
      %114 = vector.shape_cast %113 : vector<8x32xbf16> to vector<8x4x8xbf16>
      %115 = tpu.transpose %114, [1, 0, 2] : vector<8x4x8xbf16> -> vector<4x8x8xbf16>
      %c0_65 = arith.constant 0 : index
      %c0_66 = arith.constant 0 : index
      %c0_67 = arith.constant 0 : index
      %116 = vector.load %arg17[%c0_65, %c0_66, %c0_67] : memref<4x8x8xbf16, #tpu.memory_space<vmem>>, vector<4x8x8xbf16>
      tpu.vector_store %arg17[%c0_65, %c0_66, %c0_67], %115 {strides = array<i32>} : memref<4x8x8xbf16, #tpu.memory_space<vmem>>, vector<4x8x8xbf16>,
      %117 = vector.extract_strided_slice %112 {offsets = [0, 32], sizes = [8, 32], strides = [1, 1]} : vector<8x96xbf16> to vector<8x32xbf16>
      %118 = vector.shape_cast %117 : vector<8x32xbf16> to vector<8x4x8xbf16>
      %119 = tpu.transpose %118, [1, 0, 2] : vector<8x4x8xbf16> -> vector<4x8x8xbf16>
      %c0_68 = arith.constant 0 : index
      %c0_69 = arith.constant 0 : index
      %c0_70 = arith.constant 0 : index
      %120 = vector.load %arg18[%c0_68, %c0_69, %c0_70] : memref<4x8x8xbf16, #tpu.memory_space<vmem>>, vector<4x8x8xbf16>
      tpu.vector_store %arg18[%c0_68, %c0_69, %c0_70], %119 {strides = array<i32>} : memref<4x8x8xbf16, #tpu.memory_space<vmem>>, vector<4x8x8xbf16>,
      %121 = vector.extract_strided_slice %112 {offsets = [0, 64], sizes = [8, 32], strides = [1, 1]} : vector<8x96xbf16> to vector<8x32xbf16>
      %122 = vector.shape_cast %121 : vector<8x32xbf16> to vector<8x4x8xbf16>
      %123 = tpu.transpose %122, [1, 0, 2] : vector<8x4x8xbf16> -> vector<4x8x8xbf16>
      %c0_71 = arith.constant 0 : index
      %c0_72 = arith.constant 0 : index
      %c0_73 = arith.constant 0 : index
      %124 = vector.load %arg19[%c0_71, %c0_72, %c0_73] : memref<4x8x8xbf16, #tpu.memory_space<vmem>>, vector<4x8x8xbf16>
      tpu.vector_store %arg19[%c0_71, %c0_72, %c0_73], %123 {strides = array<i32>} : memref<4x8x8xbf16, #tpu.memory_space<vmem>>, vector<4x8x8xbf16>,
    } else {
    }
    %c0 = arith.constant 0 : index
    %c0_1 = arith.constant 0 : index
    %c0_2 = arith.constant 0 : index
    %3 = vector.load %arg2[%c0, %c0_1, %c0_2] : memref<1x8x32xf32, #tpu.memory_space<vmem>>, vector<1x8x32xf32>
    %4 = vector.shape_cast %3 : vector<1x8x32xf32> to vector<8x32xf32>
    %c0_3 = arith.constant 0 : index
    %c0_4 = arith.constant 0 : index
    %c0_5 = arith.constant 0 : index
    %5 = vector.load %arg3[%c0_3, %c0_4, %c0_5] : memref<1x1x8xf32, #tpu.memory_space<vmem>>, vector<1x1x8xf32>
    %c0_6 = arith.constant 0 : index
    %c0_7 = arith.constant 0 : index
    %c0_8 = arith.constant 0 : index
    %6 = vector.load %arg17[%c0_6, %c0_7, %c0_8] : memref<4x8x8xbf16, #tpu.memory_space<vmem>>, vector<4x8x8xbf16>
    %c0_9 = arith.constant 0 : index
    %c0_10 = arith.constant 0 : index
    %c0_11 = arith.constant 0 : index
    %7 = vector.load %arg18[%c0_9, %c0_10, %c0_11] : memref<4x8x8xbf16, #tpu.memory_space<vmem>>, vector<4x8x8xbf16>
    %c0_12 = arith.constant 0 : index
    %c0_13 = arith.constant 0 : index
    %c0_14 = arith.constant 0 : index
    %8 = vector.load %arg19[%c0_12, %c0_13, %c0_14] : memref<4x8x8xbf16, #tpu.memory_space<vmem>>, vector<4x8x8xbf16>
    "tpu.trace_start"() <{level = 10 : i32, message = "hqd,hkd->hqk"}> : () -> ()
    %cst = arith.constant dense<0.000000e+00> : vector<4x8x8xf32>
    %9 = tpu.matmul %6, %7, %cst {dimension_numbers = #tpu.dot_dimension_numbers<[2], [2], [1], [1], [0, 0, 0, 1, 1, 1], [0], [0]>} : vector<4x8x8xbf16>, vector<4x8x8xbf16>, vector<4x8x8xf32> -> vector<4x8x8xf32>
    "tpu.trace_stop"() : () -> ()
    %10 = vector.broadcast %5 : vector<1x1x8xf32> to vector<4x8x8xf32>
    %11 = arith.addf %9, %10 : vector<4x8x8xf32>
    %cst_15 = arith.constant dense<0xFF800000> : vector<4x8xf32>
    %12 = vector.multi_reduction <maximumf>, %11, %cst_15 [2] : vector<4x8x8xf32> to vector<4x8xf32>
    %13 = vector.shape_cast %12 : vector<4x8xf32> to vector<4x8x1xf32>
    %14 = vector.broadcast %13 : vector<4x8x1xf32> to vector<4x8x8xf32>
    %15 = arith.subf %11, %14 : vector<4x8x8xf32>
    %16 = math.exp %15 : vector<4x8x8xf32>
    %cst_16 = arith.constant dense<0.000000e+00> : vector<4x8xf32>
    %17 = vector.multi_reduction <add>, %16, %cst_16 [2] : vector<4x8x8xf32> to vector<4x8xf32>
    %18 = vector.shape_cast %17 : vector<4x8xf32> to vector<4x8x1xf32>
    %19 = tpu.reciprocal %18 {approx = true} : vector<4x8x1xf32> -> vector<4x8x1xf32>
    %20 = vector.broadcast %19 : vector<4x8x1xf32> to vector<4x8x8xf32>
    %21 = arith.mulf %16, %20 : vector<4x8x8xf32>
    %22 = arith.truncf %21 : vector<4x8x8xf32> to vector<4x8x8xbf16>
    "tpu.trace_start"() <{level = 10 : i32, message = "hqk,hkd->hqd"}> : () -> ()
    %cst_17 = arith.constant dense<0.000000e+00> : vector<4x8x8xf32>
    %23 = tpu.matmul %22, %8, %cst_17 {dimension_numbers = #tpu.dot_dimension_numbers<[2], [1], [1], [2], [0, 0, 0, 1, 1, 2], [0], [0]>} : vector<4x8x8xbf16>, vector<4x8x8xbf16>, vector<4x8x8xf32> -> vector<4x8x8xf32>
    "tpu.trace_stop"() : () -> ()
    %24 = arith.truncf %23 : vector<4x8x8xf32> to vector<4x8x8xbf16>
    %25 = tpu.transpose %24, [1, 0, 2] : vector<4x8x8xbf16> -> vector<8x4x8xbf16>
    %26 = vector.shape_cast %25 : vector<8x4x8xbf16> to vector<8x32xbf16>
    %c0_18 = arith.constant 0 : index
    %c0_19 = arith.constant 0 : index
    %27 = vector.load %arg6[%c0_18, %c0_19] : memref<32x32xbf16, #tpu.memory_space<vmem>>, vector<32x32xbf16>
    %cst_20 = arith.constant dense<0.000000e+00> : vector<8x32xf32>
    %28 = tpu.matmul %26, %27, %cst_20 {dimension_numbers = #tpu.dot_dimension_numbers<[1], [0], [0], [1], [0, 0, 1, 1], [], []>} : vector<8x32xbf16>, vector<32x32xbf16>, vector<8x32xf32> -> vector<8x32xf32>
    %c0_21 = arith.constant 0 : index
    %c0_22 = arith.constant 0 : index
    %29 = vector.load %arg7[%c0_21, %c0_22] : memref<1x32xf32, #tpu.memory_space<vmem>>, vector<1x32xf32>
    %30 = vector.broadcast %29 : vector<1x32xf32> to vector<8x32xf32>
    %31 = arith.addf %28, %30 : vector<8x32xf32>
    %32 = arith.addf %31, %4 : vector<8x32xf32>
    %cst_23 = arith.constant dense<0.000000e+00> : vector<8xf32>
    %33 = vector.multi_reduction <add>, %32, %cst_23 [1] : vector<8x32xf32> to vector<8xf32>
    %34 = vector.shape_cast %33 : vector<8xf32> to vector<8x1xf32>
    %cst_24 = arith.constant 3.200000e+01 : f32
    %35 = vector.broadcast %cst_24 : f32 to vector<8x1xf32>
    %36 = arith.divf %34, %35 : vector<8x1xf32>
    %37 = vector.broadcast %36 : vector<8x1xf32> to vector<8x32xf32>
    %38 = arith.subf %32, %37 : vector<8x32xf32>
    %39 = arith.mulf %38, %38 : vector<8x32xf32>
    %cst_25 = arith.constant dense<0.000000e+00> : vector<8xf32>
    %40 = vector.multi_reduction <add>, %39, %cst_25 [1] : vector<8x32xf32> to vector<8xf32>
    %41 = vector.shape_cast %40 : vector<8xf32> to vector<8x1xf32>
    %cst_26 = arith.constant 3.200000e+01 : f32
    %42 = vector.broadcast %cst_26 : f32 to vector<8x1xf32>
    %43 = arith.divf %41, %42 : vector<8x1xf32>
    %44 = vector.broadcast %36 : vector<8x1xf32> to vector<8x32xf32>
    %45 = arith.subf %32, %44 : vector<8x32xf32>
    %cst_27 = arith.constant 9.99999996E-13 : f32
    %46 = vector.broadcast %cst_27 : f32 to vector<8x1xf32>
    %47 = arith.addf %43, %46 : vector<8x1xf32>
    %48 = math.rsqrt %47 : vector<8x1xf32>
    %49 = vector.broadcast %48 : vector<8x1xf32> to vector<8x32xf32>
    %50 = arith.mulf %45, %49 : vector<8x32xf32>
    %c0_28 = arith.constant 0 : index
    %c0_29 = arith.constant 0 : index
    %51 = vector.load %arg8[%c0_28, %c0_29] : memref<1x32xf32, #tpu.memory_space<vmem>>, vector<1x32xf32>
    %52 = vector.broadcast %51 : vector<1x32xf32> to vector<8x32xf32>
    %53 = arith.mulf %50, %52 : vector<8x32xf32>
    %c0_30 = arith.constant 0 : index
    %c0_31 = arith.constant 0 : index
    %54 = vector.load %arg9[%c0_30, %c0_31] : memref<1x32xf32, #tpu.memory_space<vmem>>, vector<1x32xf32>
    %55 = vector.broadcast %54 : vector<1x32xf32> to vector<8x32xf32>
    %56 = arith.addf %53, %55 : vector<8x32xf32>
    %57 = arith.truncf %56 : vector<8x32xf32> to vector<8x32xbf16>
    %c0_32 = arith.constant 0 : index
    %c0_33 = arith.constant 0 : index
    %58 = vector.load %arg10[%c0_32, %c0_33] : memref<32x64xbf16, #tpu.memory_space<vmem>>, vector<32x64xbf16>
    %cst_34 = arith.constant dense<0.000000e+00> : vector<8x64xf32>
    %59 = tpu.matmul %57, %58, %cst_34 {dimension_numbers = #tpu.dot_dimension_numbers<[1], [0], [0], [1], [0, 0, 1, 1], [], []>} : vector<8x32xbf16>, vector<32x64xbf16>, vector<8x64xf32> -> vector<8x64xf32>
    %c0_35 = arith.constant 0 : index
    %c0_36 = arith.constant 0 : index
    %60 = vector.load %arg11[%c0_35, %c0_36] : memref<1x64xf32, #tpu.memory_space<vmem>>, vector<1x64xf32>
    %61 = vector.broadcast %60 : vector<1x64xf32> to vector<8x64xf32>
    %62 = arith.addf %59, %61 : vector<8x64xf32>
    %cst_37 = arith.constant 5.000000e-01 : f32
    %63 = vector.broadcast %cst_37 : f32 to vector<8x64xf32>
    %64 = arith.mulf %62, %63 : vector<8x64xf32>
    %cst_38 = arith.constant 0.707106769 : f32
    %65 = vector.broadcast %cst_38 : f32 to vector<8x64xf32>
    %66 = arith.mulf %62, %65 : vector<8x64xf32>
    %67 = math.erf %66 : vector<8x64xf32>
    %cst_39 = arith.constant 1.000000e+00 : f32
    %68 = vector.broadcast %cst_39 : f32 to vector<8x64xf32>
    %69 = arith.addf %68, %67 : vector<8x64xf32>
    %70 = arith.mulf %64, %69 : vector<8x64xf32>
    %71 = arith.truncf %70 : vector<8x64xf32> to vector<8x64xbf16>
    %c0_40 = arith.constant 0 : index
    %c0_41 = arith.constant 0 : index
    %72 = vector.load %arg12[%c0_40, %c0_41] : memref<64x32xbf16, #tpu.memory_space<vmem>>, vector<64x32xbf16>
    %cst_42 = arith.constant dense<0.000000e+00> : vector<8x32xf32>
    %73 = tpu.matmul %71, %72, %cst_42 {dimension_numbers = #tpu.dot_dimension_numbers<[1], [0], [0], [1], [0, 0, 1, 1], [], []>} : vector<8x64xbf16>, vector<64x32xbf16>, vector<8x32xf32> -> vector<8x32xf32>
    %c0_43 = arith.constant 0 : index
    %c0_44 = arith.constant 0 : index
    %74 = vector.load %arg13[%c0_43, %c0_44] : memref<1x32xf32, #tpu.memory_space<vmem>>, vector<1x32xf32>
    %75 = vector.broadcast %74 : vector<1x32xf32> to vector<8x32xf32>
    %76 = arith.addf %73, %75 : vector<8x32xf32>
    %77 = arith.addf %76, %56 : vector<8x32xf32>
    %cst_45 = arith.constant dense<0.000000e+00> : vector<8xf32>
    %78 = vector.multi_reduction <add>, %77, %cst_45 [1] : vector<8x32xf32> to vector<8xf32>
    %79 = vector.shape_cast %78 : vector<8xf32> to vector<8x1xf32>
    %cst_46 = arith.constant 3.200000e+01 : f32
    %80 = vector.broadcast %cst_46 : f32 to vector<8x1xf32>
    %81 = arith.divf %79, %80 : vector<8x1xf32>
    %82 = vector.broadcast %81 : vector<8x1xf32> to vector<8x32xf32>
    %83 = arith.subf %77, %82 : vector<8x32xf32>
    %84 = arith.mulf %83, %83 : vector<8x32xf32>
    %cst_47 = arith.constant dense<0.000000e+00> : vector<8xf32>
    %85 = vector.multi_reduction <add>, %84, %cst_47 [1] : vector<8x32xf32> to vector<8xf32>
    %86 = vector.shape_cast %85 : vector<8xf32> to vector<8x1xf32>
    %cst_48 = arith.constant 3.200000e+01 : f32
    %87 = vector.broadcast %cst_48 : f32 to vector<8x1xf32>
    %88 = arith.divf %86, %87 : vector<8x1xf32>
    %89 = vector.broadcast %81 : vector<8x1xf32> to vector<8x32xf32>
    %90 = arith.subf %77, %89 : vector<8x32xf32>
    %cst_49 = arith.constant 9.99999996E-13 : f32
    %91 = vector.broadcast %cst_49 : f32 to vector<8x1xf32>
    %92 = arith.addf %88, %91 : vector<8x1xf32>
    %93 = math.rsqrt %92 : vector<8x1xf32>
    %94 = vector.broadcast %93 : vector<8x1xf32> to vector<8x32xf32>
    %95 = arith.mulf %90, %94 : vector<8x32xf32>
    %c0_50 = arith.constant 0 : index
    %c0_51 = arith.constant 0 : index
    %96 = vector.load %arg14[%c0_50, %c0_51] : memref<1x32xf32, #tpu.memory_space<vmem>>, vector<1x32xf32>
    %97 = vector.broadcast %96 : vector<1x32xf32> to vector<8x32xf32>
    %98 = arith.mulf %95, %97 : vector<8x32xf32>
    %c0_52 = arith.constant 0 : index
    %c0_53 = arith.constant 0 : index
    %99 = vector.load %arg15[%c0_52, %c0_53] : memref<1x32xf32, #tpu.memory_space<vmem>>, vector<1x32xf32>
    %100 = vector.broadcast %99 : vector<1x32xf32> to vector<8x32xf32>
    %101 = arith.addf %98, %100 : vector<8x32xf32>
    %102 = vector.shape_cast %101 : vector<8x32xf32> to vector<1x8x32xf32>
    %c0_54 = arith.constant 0 : index
    %c0_55 = arith.constant 0 : index
    %c0_56 = arith.constant 0 : index
    %103 = vector.load %arg16[%c0_54, %c0_55, %c0_56] : memref<1x8x32xf32, #tpu.memory_space<vmem>>, vector<1x8x32xf32>
    tpu.vector_store %arg16[%c0_54, %c0_55, %c0_56], %102 {strides = array<i32>} : memref<1x8x32xf32, #tpu.memory_space<vmem>>, vector<1x8x32xf32>,
    return
  }
  func.func @transform_0(%arg0: i32, %arg1: i32) -> (i32, i32, i32) {
    %c0_i32 = arith.constant 0 : i32
    %c0_i32_0 = arith.constant 0 : i32
    %c0_i32_1 = arith.constant 0 : i32
    return %arg0, %c0_i32, %c0_i32_0 : i32, i32, i32
  }
  func.func @transform_1(%arg0: i32, %arg1: i32) -> (i32, i32, i32) {
    %c0_i32 = arith.constant 0 : i32
    %c0_i32_0 = arith.constant 0 : i32
    %c0_i32_1 = arith.constant 0 : i32
    return %arg0, %c0_i32, %c0_i32_0 : i32, i32, i32
  }
  func.func @transform_2(%arg0: i32, %arg1: i32) -> (i32, i32) {
    %c0_i32 = arith.constant 0 : i32
    %c0_i32_0 = arith.constant 0 : i32
    %c0_i32_1 = arith.constant 0 : i32
    return %c0_i32, %c0_i32_0 : i32, i32
  }
  func.func @transform_3(%arg0: i32, %arg1: i32) -> (i32, i32) {
    %c0_i32 = arith.constant 0 : i32
    %c0_i32_0 = arith.constant 0 : i32
    %c0_i32_1 = arith.constant 0 : i32
    return %c0_i32, %c0_i32_0 : i32, i32
  }
  func.func @transform_4(%arg0: i32, %arg1: i32) -> (i32, i32) {
    %c0_i32 = arith.constant 0 : i32
    %c0_i32_0 = arith.constant 0 : i32
    %c0_i32_1 = arith.constant 0 : i32
    return %c0_i32, %c0_i32_0 : i32, i32
  }
  func.func @transform_5(%arg0: i32, %arg1: i32) -> (i32, i32) {
    %c0_i32 = arith.constant 0 : i32
    %c0_i32_0 = arith.constant 0 : i32
    %c0_i32_1 = arith.constant 0 : i32
    return %c0_i32, %c0_i32_0 : i32, i32
  }
  func.func @transform_6(%arg0: i32, %arg1: i32) -> (i32, i32) {
    %c0_i32 = arith.constant 0 : i32
    %c0_i32_0 = arith.constant 0 : i32
    %c0_i32_1 = arith.constant 0 : i32
    return %c0_i32, %c0_i32_0 : i32, i32
  }
  func.func @transform_7(%arg0: i32, %arg1: i32) -> (i32, i32) {
    %c0_i32 = arith.constant 0 : i32
    %c0_i32_0 = arith.constant 0 : i32
    %c0_i32_1 = arith.constant 0 : i32
    return %c0_i32, %c0_i32_0 : i32, i32
  }
  func.func @transform_8(%arg0: i32, %arg1: i32) -> (i32, i32) {
    %c0_i32 = arith.constant 0 : i32
    %c0_i32_0 = arith.constant 0 : i32
    %c0_i32_1 = arith.constant 0 : i32
    return %c0_i32, %c0_i32_0 : i32, i32
  }
  func.func @transform_9(%arg0: i32, %arg1: i32) -> (i32, i32) {
    %c0_i32 = arith.constant 0 : i32
    %c0_i32_0 = arith.constant 0 : i32
    %c0_i32_1 = arith.constant 0 : i32
    return %c0_i32, %c0_i32_0 : i32, i32
  }
  func.func @transform_10(%arg0: i32, %arg1: i32) -> (i32, i32) {
    %c0_i32 = arith.constant 0 : i32
    %c0_i32_0 = arith.constant 0 : i32
    %c0_i32_1 = arith.constant 0 : i32
    return %c0_i32, %c0_i32_0 : i32, i32
  }
  func.func @transform_11(%arg0: i32, %arg1: i32) -> (i32, i32) {
    %c0_i32 = arith.constant 0 : i32
    %c0_i32_0 = arith.constant 0 : i32
    %c0_i32_1 = arith.constant 0 : i32
    return %c0_i32, %c0_i32_0 : i32, i32
  }
  func.func @transform_12(%arg0: i32, %arg1: i32) -> (i32, i32) {
    %c0_i32 = arith.constant 0 : i32
    %c0_i32_0 = arith.constant 0 : i32
    %c0_i32_1 = arith.constant 0 : i32
    return %c0_i32, %c0_i32_0 : i32, i32
  }
  func.func @transform_13(%arg0: i32, %arg1: i32) -> (i32, i32) {
    %c0_i32 = arith.constant 0 : i32
    %c0_i32_0 = arith.constant 0 : i32
    %c0_i32_1 = arith.constant 0 : i32
    return %c0_i32, %c0_i32_0 : i32, i32
  }
  func.func @transform_14(%arg0: i32, %arg1: i32) -> (i32, i32, i32) {
    %c0_i32 = arith.constant 0 : i32
    %c0_i32_0 = arith.constant 0 : i32
    return %arg0, %arg1, %c0_i32 : i32, i32, i32
  }
}

</mosaic_0001>

<llo_original>
// kernel: tpu_custom_call.1
$region0: #{tpu_custom_call.1}
  #allocation0 [shape = 'u32[]', space=smem, size = 0x4, offset = 0x4, fixed_abs, tag = 'smem constant byte address 0x4 - core index']
  #allocation1 [shape = 'u32[72,128]{1,0:T(1,128)}', space=vmem, size = 0x9000, scoped, tag = 'internal scratch']
  #allocation2 [shape = 'bf16[4,8,8]{2,1,0:T(8,128)(2,1)}', space=vmem, size = 0x2000, scoped, tag = 'scratch operand']
  #allocation3 [shape = 'bf16[4,8,8]{2,1,0:T(8,128)(2,1)}', space=vmem, size = 0x2000, scoped, tag = 'scratch operand']
  #allocation4 [shape = 'bf16[4,8,8]{2,1,0:T(8,128)(2,1)}', space=vmem, size = 0x2000, scoped, tag = 'scratch operand']
  %s0 = inlined_call_operand.vmem [shape: f32[2,8,32], index: 0, kind: input, shape index: {}]
  %s1 = inlined_call_operand.hbm [shape: f32[2,1,8], index: 1, kind: input, shape index: {}]
  %s2 = inlined_call_operand.vmem [shape: bf16[32,96], index: 2, kind: input, shape index: {}]
  %s3 = inlined_call_operand.vmem [shape: f32[1,96], index: 3, kind: input, shape index: {}]
  %s4 = inlined_call_operand.vmem [shape: bf16[32,32], index: 4, kind: input, shape index: {}]
  %s5 = inlined_call_operand.vmem [shape: f32[1,32], index: 5, kind: input, shape index: {}]
  %s6 = inlined_call_operand.vmem [shape: f32[1,32], index: 6, kind: input, shape index: {}]
  %s7 = inlined_call_operand.vmem [shape: f32[1,32], index: 7, kind: input, shape index: {}]
  %s8 = inlined_call_operand.hbm [shape: bf16[32,64], index: 8, kind: input, shape index: {}]
  %s9 = inlined_call_operand.vmem [shape: f32[1,64], index: 9, kind: input, shape index: {}]
  %s10 = inlined_call_operand.vmem [shape: bf16[64,32], index: 10, kind: input, shape index: {}]
  %s11 = inlined_call_operand.vmem [shape: f32[1,32], index: 11, kind: input, shape index: {}]
  %s12 = inlined_call_operand.vmem [shape: f32[1,32], index: 12, kind: input, shape index: {}]
  %s13 = inlined_call_operand.vmem [shape: f32[1,32], index: 13, kind: input, shape index: {}]
  %s14 = inlined_call_operand.hbm [shape: f32[2,8,32], index: 14, kind: output, shape index: {}]
  %s15 = sld [smem:[#allocation0]]
  $region101: #{tpu_custom_call.1} parent=0
    _
  %s17 = ssub.s32 1, %s15
  %s18 = scalar_select 0, %s17, %s15
  $region1: #{tpu_custom_call.1} parent=0
    #allocation5 [shape = 'u8[1024]{0}', space=vmem, size = 0x400, scoped, tag = 'input window, operand 1']
    #allocation6 [shape = 's32[2]{0}', space=sflag, size = 0x8, scoped, tag = 'scoped memory for tpu_custom_call.1']
    #allocation7 [shape = 's32[2]{0}', space=sflag, size = 0x8, scoped, tag = 'scoped memory for tpu_custom_call.1']
    #allocation8 [shape = 'u8[8192]{0}', space=vmem, size = 0x2000, scoped, tag = 'input window, operand 8, single buffered']
    #allocation9 [shape = 's32[1]{0}', space=sflag, size = 0x4, scoped, tag = 'scoped memory for tpu_custom_call.1']
    #allocation10 [shape = 'u8[8192]{0}', space=vmem, size = 0x2000, scoped, tag = 'output window, operand 0']
    %19 = vsyncpa [#allocation6], 0
    %s20 = scalar_lea.sflag [#allocation6], 1
    %21 = vsyncpa %s20, 0
    %22 = vsyncpa [#allocation9], 0
    %23 = vsyncpa [#allocation7], 0
    %s24 = scalar_lea.sflag [#allocation7], 1
    %25 = vsyncpa %s24, 0
    loop: start=0, step=1, limit=4
    $region2: #{tpu_custom_call.1} parent=1 // loop_pre_header
      _
    $region3: #{tpu_custom_call.1} parent=1 // loop_header
      %s27 = sphi 0, %s31
      %p28 = scmp.ge.s32.totalorder %s27, 4
      %s34 = sphi 0, %s46
      %s35 = sphi 0, %s42
      %s36 = sphi 0, %s34
      %s37 = sphi 0, %s35
      %s38 = sphi 0, %s36
      %s39 = sphi 0, %s37
      %s49 = sphi 0, %s51
      %s52 = sphi 0, %s49
      %s53 = sphi 0, %s52
      %s69 = sphi 0, %s53
      %s75 = sphi 0, %s77
      %s78 = sphi 0, %s75
      %s79 = sphi 0, %s78
      %s95 = sphi 0, %s79
      %s99 = sphi 0, %s99
      %s101 = sphi 0, %s99
      %s102 = sphi 0, %s101
      %s116 = sphi 0, %s102
      %s120 = sphi 0, %s120
      %s122 = sphi 0, %s120
      %s123 = sphi 0, %s122
      %s137 = sphi 0, %s123
      %s141 = sphi 0, %s141
      %s143 = sphi 0, %s141
      %s144 = sphi 0, %s143
      %s158 = sphi 0, %s144
      %s162 = sphi 0, %s162
      %s164 = sphi 0, %s162
      %s165 = sphi 0, %s164
      %s179 = sphi 0, %s165
      %s183 = sphi 0, %s183
      %s185 = sphi 0, %s183
      %s186 = sphi 0, %s185
      %s200 = sphi 0, %s186
      %s204 = sphi 0, %s204
      %s206 = sphi 0, %s204
      %s207 = sphi 0, %s206
      %s221 = sphi 0, %s207
      %s225 = sphi 0, %s225
      %s227 = sphi 0, %s225
      %s228 = sphi 0, %s227
      %s242 = sphi 0, %s228
      %s246 = sphi 0, %s246
      %s248 = sphi 0, %s246
      %s249 = sphi 0, %s248
      %s263 = sphi 0, %s249
      %s267 = sphi 0, %s267
      %s269 = sphi 0, %s267
      %s270 = sphi 0, %s269
      %s284 = sphi 0, %s270
      %s288 = sphi 0, %s288
      %s290 = sphi 0, %s288
      %s291 = sphi 0, %s290
      %s305 = sphi 0, %s291
      %s309 = sphi 0, %s309
      %s311 = sphi 0, %s309
      %s312 = sphi 0, %s311
      %s326 = sphi 0, %s312
      %s330 = sphi 0, %s330
      %s332 = sphi 0, %s330
      %s333 = sphi 0, %s332
      %s347 = sphi 0, %s333
      %s355 = sphi 0, %s357
      %s358 = sphi 0, %s355
      %s359 = sphi 0, %s358
      %s375 = sphi 0, %s359
    $region4: #{tpu_custom_call.1} parent=1 // loop_header_branch
      %30 = sbr.rel (%p28) target = $region8
    $region5: #{tpu_custom_call.1} parent=1 // loop_body
      %s32 = ssub.s32 %s27, 1
      %s33 = ssub.s32 %s27, 2
      %s40 = sadd.s32 1, %s35
      %p41 = scmp.ge.s32.totalorder %s40, 1
      %s42 = scalar_select %p41, 0, %s40
      %s43 = sadd.s32 1, %s34
      %s44 = scalar_select %p41, %s43, %s34
      %p45 = scmp.ge.s32.totalorder %s44, 2
      %s46 = scalar_select %p45, 0, %s44
      %s47 = ssub.s32 %s34, %s46
      %p48 = scmp.eq.s32.totalorder %s47, 0
      %s50 = sadd.s32 %s49, 1
      %s51 = scalar_select %p48, %s49, %s50
      %p54 = pneg %p48
      %p55 = scmp.eq.s32.totalorder %s27, 1
      %p56 = por %p54, %p55
      %p57 = scmp.ne.s32.totalorder %s49, %s52
      %p58 = scmp.eq.s32.totalorder %s27, 0
      %p59 = por %p57, %p58
      %p60 = scmp.ne.s32.totalorder %s49, %s52
      %p61 = scmp.eq.s32.totalorder %s32, 1
      %p62 = por %p60, %p61
      %p63 = scmp.ne.s32.totalorder %s52, %s53
      %p64 = scmp.eq.s32.totalorder %s32, 0
      %p65 = por %p63, %p64
      %p66 = scmp.ne.s32.totalorder %s52, %s53
      %p67 = scmp.eq.s32.totalorder %s33, 1
      %p68 = por %p66, %p67
      %p70 = scmp.ne.s32.totalorder %s53, %s69
      %p71 = scmp.eq.s32.totalorder %s33, 0
      %p72 = por %p70, %p71
      %s73 = ssub.s32 %s34, %s46
      %p74 = scmp.eq.s32.totalorder %s73, 0
      %s76 = sadd.s32 %s75, 1
      %s77 = scalar_select %p74, %s75, %s76
      %p80 = pneg %p74
      %p81 = scmp.eq.s32.totalorder %s27, 1
      %p82 = por %p80, %p81
      %p83 = scmp.ne.s32.totalorder %s75, %s78
      %p84 = scmp.eq.s32.totalorder %s27, 0
      %p85 = por %p83, %p84
      %p86 = scmp.ne.s32.totalorder %s75, %s78
      %p87 = scmp.eq.s32.totalorder %s32, 1
      %p88 = por %p86, %p87
      %p89 = scmp.ne.s32.totalorder %s78, %s79
      %p90 = scmp.eq.s32.totalorder %s32, 0
      %p91 = por %p89, %p90
      %p92 = scmp.ne.s32.totalorder %s78, %s79
      %p93 = scmp.eq.s32.totalorder %s33, 1
      %p94 = por %p92, %p93
      %p96 = scmp.ne.s32.totalorder %s79, %s95
      %p97 = scmp.eq.s32.totalorder %s33, 0
      %p98 = por %p96, %p97
      %s100 = sadd.s32 %s99, 1
      %p103 = scmp.eq.s32.totalorder %s27, 1
      %p104 = scmp.ne.s32.totalorder %s99, %s101
      %p105 = scmp.eq.s32.totalorder %s27, 0
      %p106 = por %p104, %p105
      %p107 = scmp.ne.s32.totalorder %s99, %s101
      %p108 = scmp.eq.s32.totalorder %s32, 1
      %p109 = por %p107, %p108
      %p110 = scmp.ne.s32.totalorder %s101, %s102
      %p111 = scmp.eq.s32.totalorder %s32, 0
      %p112 = por %p110, %p111
      %p113 = scmp.ne.s32.totalorder %s101, %s102
      %p114 = scmp.eq.s32.totalorder %s33, 1
      %p115 = por %p113, %p114
      %p117 = scmp.ne.s32.totalorder %s102, %s116
      %p118 = scmp.eq.s32.totalorder %s33, 0
      %p119 = por %p117, %p118
      %s121 = sadd.s32 %s120, 1
      %p124 = scmp.eq.s32.totalorder %s27, 1
      %p125 = scmp.ne.s32.totalorder %s120, %s122
      %p126 = scmp.eq.s32.totalorder %s27, 0
      %p127 = por %p125, %p126
      %p128 = scmp.ne.s32.totalorder %s120, %s122
      %p129 = scmp.eq.s32.totalorder %s32, 1
      %p130 = por %p128, %p129
      %p131 = scmp.ne.s32.totalorder %s122, %s123
      %p132 = scmp.eq.s32.totalorder %s32, 0
      %p133 = por %p131, %p132
      %p134 = scmp.ne.s32.totalorder %s122, %s123
      %p135 = scmp.eq.s32.totalorder %s33, 1
      %p136 = por %p134, %p135
      %p138 = scmp.ne.s32.totalorder %s123, %s137
      %p139 = scmp.eq.s32.totalorder %s33, 0
      %p140 = por %p138, %p139
      %s142 = sadd.s32 %s141, 1
      %p145 = scmp.eq.s32.totalorder %s27, 1
      %p146 = scmp.ne.s32.totalorder %s141, %s143
      %p147 = scmp.eq.s32.totalorder %s27, 0
      %p148 = por %p146, %p147
      %p149 = scmp.ne.s32.totalorder %s141, %s143
      %p150 = scmp.eq.s32.totalorder %s32, 1
      %p151 = por %p149, %p150
      %p152 = scmp.ne.s32.totalorder %s143, %s144
      %p153 = scmp.eq.s32.totalorder %s32, 0
      %p154 = por %p152, %p153
      %p155 = scmp.ne.s32.totalorder %s143, %s144
      %p156 = scmp.eq.s32.totalorder %s33, 1
      %p157 = por %p155, %p156
      %p159 = scmp.ne.s32.totalorder %s144, %s158
      %p160 = scmp.eq.s32.totalorder %s33, 0
      %p161 = por %p159, %p160
      %s163 = sadd.s32 %s162, 1
      %p166 = scmp.eq.s32.totalorder %s27, 1
      %p167 = scmp.ne.s32.totalorder %s162, %s164
      %p168 = scmp.eq.s32.totalorder %s27, 0
      %p169 = por %p167, %p168
      %p170 = scmp.ne.s32.totalorder %s162, %s164
      %p171 = scmp.eq.s32.totalorder %s32, 1
      %p172 = por %p170, %p171
      %p173 = scmp.ne.s32.totalorder %s164, %s165
      %p174 = scmp.eq.s32.totalorder %s32, 0
      %p175 = por %p173, %p174
      %p176 = scmp.ne.s32.totalorder %s164, %s165
      %p177 = scmp.eq.s32.totalorder %s33, 1
      %p178 = por %p176, %p177
      %p180 = scmp.ne.s32.totalorder %s165, %s179
      %p181 = scmp.eq.s32.totalorder %s33, 0
      %p182 = por %p180, %p181
      %s184 = sadd.s32 %s183, 1
      %p187 = scmp.eq.s32.totalorder %s27, 1
      %p188 = scmp.ne.s32.totalorder %s183, %s185
      %p189 = scmp.eq.s32.totalorder %s27, 0
      %p190 = por %p188, %p189
      %p191 = scmp.ne.s32.totalorder %s183, %s185
      %p192 = scmp.eq.s32.totalorder %s32, 1
      %p193 = por %p191, %p192
      %p194 = scmp.ne.s32.totalorder %s185, %s186
      %p195 = scmp.eq.s32.totalorder %s32, 0
      %p196 = por %p194, %p195
      %p197 = scmp.ne.s32.totalorder %s185, %s186
      %p198 = scmp.eq.s32.totalorder %s33, 1
      %p199 = por %p197, %p198
      %p201 = scmp.ne.s32.totalorder %s186, %s200
      %p202 = scmp.eq.s32.totalorder %s33, 0
      %p203 = por %p201, %p202
      %s205 = sadd.s32 %s204, 1
      %p208 = scmp.eq.s32.totalorder %s27, 1
      %p209 = scmp.ne.s32.totalorder %s204, %s206
      %p210 = scmp.eq.s32.totalorder %s27, 0
      %p211 = por %p209, %p210
      %p212 = scmp.ne.s32.totalorder %s204, %s206
      %p213 = scmp.eq.s32.totalorder %s32, 1
      %p214 = por %p212, %p213
      %p215 = scmp.ne.s32.totalorder %s206, %s207
      %p216 = scmp.eq.s32.totalorder %s32, 0
      %p217 = por %p215, %p216
      %p218 = scmp.ne.s32.totalorder %s206, %s207
      %p219 = scmp.eq.s32.totalorder %s33, 1
      %p220 = por %p218, %p219
      %p222 = scmp.ne.s32.totalorder %s207, %s221
      %p223 = scmp.eq.s32.totalorder %s33, 0
      %p224 = por %p222, %p223
      %s226 = sadd.s32 %s225, 1
      %p229 = scmp.eq.s32.totalorder %s27, 1
      %p230 = scmp.ne.s32.totalorder %s225, %s227
      %p231 = scmp.eq.s32.totalorder %s27, 0
      %p232 = por %p230, %p231
      %p233 = scmp.ne.s32.totalorder %s225, %s227
      %p234 = scmp.eq.s32.totalorder %s32, 1
      %p235 = por %p233, %p234
      %p236 = scmp.ne.s32.totalorder %s227, %s228
      %p237 = scmp.eq.s32.totalorder %s32, 0
      %p238 = por %p236, %p237
      %p239 = scmp.ne.s32.totalorder %s227, %s228
      %p240 = scmp.eq.s32.totalorder %s33, 1
      %p241 = por %p239, %p240
      %p243 = scmp.ne.s32.totalorder %s228, %s242
      %p244 = scmp.eq.s32.totalorder %s33, 0
      %p245 = por %p243, %p244
      %s247 = sadd.s32 %s246, 1
      %p250 = scmp.eq.s32.totalorder %s27, 1
      %p251 = scmp.ne.s32.totalorder %s246, %s248
      %p252 = scmp.eq.s32.totalorder %s27, 0
      %p253 = por %p251, %p252
      %p254 = scmp.ne.s32.totalorder %s246, %s248
      %p255 = scmp.eq.s32.totalorder %s32, 1
      %p256 = por %p254, %p255
      %p257 = scmp.ne.s32.totalorder %s248, %s249
      %p258 = scmp.eq.s32.totalorder %s32, 0
      %p259 = por %p257, %p258
      %p260 = scmp.ne.s32.totalorder %s248, %s249
      %p261 = scmp.eq.s32.totalorder %s33, 1
      %p262 = por %p260, %p261
      %p264 = scmp.ne.s32.totalorder %s249, %s263
      %p265 = scmp.eq.s32.totalorder %s33, 0
      %p266 = por %p264, %p265
      %s268 = sadd.s32 %s267, 1
      %p271 = scmp.eq.s32.totalorder %s27, 1
      %p272 = scmp.ne.s32.totalorder %s267, %s269
      %p273 = scmp.eq.s32.totalorder %s27, 0
      %p274 = por %p272, %p273
      %p275 = scmp.ne.s32.totalorder %s267, %s269
      %p276 = scmp.eq.s32.totalorder %s32, 1
      %p277 = por %p275, %p276
      %p278 = scmp.ne.s32.totalorder %s269, %s270
      %p279 = scmp.eq.s32.totalorder %s32, 0
      %p280 = por %p278, %p279
      %p281 = scmp.ne.s32.totalorder %s269, %s270
      %p282 = scmp.eq.s32.totalorder %s33, 1
      %p283 = por %p281, %p282
      %p285 = scmp.ne.s32.totalorder %s270, %s284
      %p286 = scmp.eq.s32.totalorder %s33, 0
      %p287 = por %p285, %p286
      %s289 = sadd.s32 %s288, 1
      %p292 = scmp.eq.s32.totalorder %s27, 1
      %p293 = scmp.ne.s32.totalorder %s288, %s290
      %p294 = scmp.eq.s32.totalorder %s27, 0
      %p295 = por %p293, %p294
      %p296 = scmp.ne.s32.totalorder %s288, %s290
      %p297 = scmp.eq.s32.totalorder %s32, 1
      %p298 = por %p296, %p297
      %p299 = scmp.ne.s32.totalorder %s290, %s291
      %p300 = scmp.eq.s32.totalorder %s32, 0
      %p301 = por %p299, %p300
      %p302 = scmp.ne.s32.totalorder %s290, %s291
      %p303 = scmp.eq.s32.totalorder %s33, 1
      %p304 = por %p302, %p303
      %p306 = scmp.ne.s32.totalorder %s291, %s305
      %p307 = scmp.eq.s32.totalorder %s33, 0
      %p308 = por %p306, %p307
      %s310 = sadd.s32 %s309, 1
      %p313 = scmp.eq.s32.totalorder %s27, 1
      %p314 = scmp.ne.s32.totalorder %s309, %s311
      %p315 = scmp.eq.s32.totalorder %s27, 0
      %p316 = por %p314, %p315
      %p317 = scmp.ne.s32.totalorder %s309, %s311
      %p318 = scmp.eq.s32.totalorder %s32, 1
      %p319 = por %p317, %p318
      %p320 = scmp.ne.s32.totalorder %s311, %s312
      %p321 = scmp.eq.s32.totalorder %s32, 0
      %p322 = por %p320, %p321
      %p323 = scmp.ne.s32.totalorder %s311, %s312
      %p324 = scmp.eq.s32.totalorder %s33, 1
      %p325 = por %p323, %p324
      %p327 = scmp.ne.s32.totalorder %s312, %s326
      %p328 = scmp.eq.s32.totalorder %s33, 0
      %p329 = por %p327, %p328
      %s331 = sadd.s32 %s330, 1
      %p334 = scmp.eq.s32.totalorder %s27, 1
      %p335 = scmp.ne.s32.totalorder %s330, %s332
      %p336 = scmp.eq.s32.totalorder %s27, 0
      %p337 = por %p335, %p336
      %p338 = scmp.ne.s32.totalorder %s330, %s332
      %p339 = scmp.eq.s32.totalorder %s32, 1
      %p340 = por %p338, %p339
      %p341 = scmp.ne.s32.totalorder %s332, %s333
      %p342 = scmp.eq.s32.totalorder %s32, 0
      %p343 = por %p341, %p342
      %p344 = scmp.ne.s32.totalorder %s332, %s333
      %p345 = scmp.eq.s32.totalorder %s33, 1
      %p346 = por %p344, %p345
      %p348 = scmp.ne.s32.totalorder %s333, %s347
      %p349 = scmp.eq.s32.totalorder %s33, 0
      %p350 = por %p348, %p349
      %s351 = ssub.s32 %s34, %s46
      %s352 = ssub.s32 %s35, %s42
      %s353 = sor.u32 %s351, %s352
      %p354 = scmp.eq.s32.totalorder %s353, 0
      %s356 = sadd.s32 %s355, 1
      %s357 = scalar_select %p354, %s355, %s356
      %p360 = pneg %p354
      %p361 = scmp.eq.s32.totalorder %s27, 1
      %p362 = por %p360, %p361
      %p363 = scmp.ne.s32.totalorder %s355, %s358
      %p364 = scmp.eq.s32.totalorder %s27, 0
      %p365 = por %p363, %p364
      %p366 = scmp.ne.s32.totalorder %s355, %s358
      %p367 = scmp.eq.s32.totalorder %s32, 1
      %p368 = por %p366, %p367
      %p369 = scmp.ne.s32.totalorder %s358, %s359
      %p370 = scmp.eq.s32.totalorder %s32, 0
      %p371 = por %p369, %p370
      %p372 = scmp.ne.s32.totalorder %s358, %s359
      %p373 = scmp.eq.s32.totalorder %s33, 1
      %p374 = por %p372, %p373
      %p376 = scmp.ne.s32.totalorder %s359, %s375
      %p377 = scmp.eq.s32.totalorder %s33, 0
      %p378 = por %p376, %p377
      %p379 = scmp.le.s32.totalorder 1, %s27
      %p380 = scmp.lt.s32.totalorder %s27, 3
      %p381 = pnand %p379, %p380
      %p382 = pneg %p381
      // Predicated region
      $region9: #{tpu_custom_call.1} parent=5 // pred_check
        _
      $region10: #{tpu_custom_call.1} parent=5 // pred_check_branch
        %384 = sbr.rel (%p381) target = $region12
      $region11: #{tpu_custom_call.1} parent=5 // pred_region
        %s385 = ssub.s32 %s27, 1
        // Predicated region
        $region13: #{tpu_custom_call.1} parent=11 // pred_check
          %p386 = pneg %p112
        $region14: #{tpu_custom_call.1} parent=11 // pred_check_branch
          %388 = sbr.rel (%p386) target = $region16
        $region15: #{tpu_custom_call.1} parent=11 // pred_region
          _
        $region16: #{tpu_custom_call.1} parent=11 // pred_fallthru
          _
        // Predicated region
        $region17: #{tpu_custom_call.1} parent=11 // pred_check
          %p389 = pneg %p133
        $region18: #{tpu_custom_call.1} parent=11 // pred_check_branch
          %391 = sbr.rel (%p389) target = $region20
        $region19: #{tpu_custom_call.1} parent=11 // pred_region
          _
        $region20: #{tpu_custom_call.1} parent=11 // pred_fallthru
          _
        // Predicated region
        $region21: #{tpu_custom_call.1} parent=11 // pred_check
          %p392 = pneg %p154
        $region22: #{tpu_custom_call.1} parent=11 // pred_check_branch
          %394 = sbr.rel (%p392) target = $region24
        $region23: #{tpu_custom_call.1} parent=11 // pred_region
          _
        $region24: #{tpu_custom_call.1} parent=11 // pred_fallthru
          _
        // Predicated region
        $region25: #{tpu_custom_call.1} parent=11 // pred_check
          %p395 = pneg %p175
        $region26: #{tpu_custom_call.1} parent=11 // pred_check_branch
          %397 = sbr.rel (%p395) target = $region28
        $region27: #{tpu_custom_call.1} parent=11 // pred_region
          _
        $region28: #{tpu_custom_call.1} parent=11 // pred_fallthru
          _
        // Predicated region
        $region29: #{tpu_custom_call.1} parent=11 // pred_check
          %p398 = pneg %p196
        $region30: #{tpu_custom_call.1} parent=11 // pred_check_branch
          %400 = sbr.rel (%p398) target = $region32
        $region31: #{tpu_custom_call.1} parent=11 // pred_region
          _
        $region32: #{tpu_custom_call.1} parent=11 // pred_fallthru
          _
        // Predicated region
        $region33: #{tpu_custom_call.1} parent=11 // pred_check
          %p401 = pneg %p217
        $region34: #{tpu_custom_call.1} parent=11 // pred_check_branch
          %403 = sbr.rel (%p401) target = $region36
        $region35: #{tpu_custom_call.1} parent=11 // pred_region
          _
        $region36: #{tpu_custom_call.1} parent=11 // pred_fallthru
          _
        // Predicated region
        $region37: #{tpu_custom_call.1} parent=11 // pred_check
          %p404 = pneg %p238
        $region38: #{tpu_custom_call.1} parent=11 // pred_check_branch
          %406 = sbr.rel (%p404) target = $region40
        $region39: #{tpu_custom_call.1} parent=11 // pred_region
          %408 = vsyncadd [#allocation9], 0
          %s409 = sshll.u32 %s8, 4
          %s410 = int_to_ptr.hbm [resolvable:$true] %s409
          %s411 = sshll.u32 [#allocation8], 4
          %s412 = int_to_ptr.vmem [resolvable:$true] %s411
          %417 = dma.hbm_to_vmem [thread:$0]  %s410, 256, %s412, [#allocation9], 64, 64, 4
        $region40: #{tpu_custom_call.1} parent=11 // pred_fallthru
          _
        // Predicated region
        $region41: #{tpu_custom_call.1} parent=11 // pred_check
          %p418 = pneg %p259
        $region42: #{tpu_custom_call.1} parent=11 // pred_check_branch
          %420 = sbr.rel (%p418) target = $region44
        $region43: #{tpu_custom_call.1} parent=11 // pred_region
          _
        $region44: #{tpu_custom_call.1} parent=11 // pred_fallthru
          _
        // Predicated region
        $region45: #{tpu_custom_call.1} parent=11 // pred_check
          %p421 = pneg %p280
        $region46: #{tpu_custom_call.1} parent=11 // pred_check_branch
          %423 = sbr.rel (%p421) target = $region48
        $region47: #{tpu_custom_call.1} parent=11 // pred_region
          _
        $region48: #{tpu_custom_call.1} parent=11 // pred_fallthru
          _
        // Predicated region
        $region49: #{tpu_custom_call.1} parent=11 // pred_check
          %p424 = pneg %p301
        $region50: #{tpu_custom_call.1} parent=11 // pred_check_branch
          %426 = sbr.rel (%p424) target = $region52
        $region51: #{tpu_custom_call.1} parent=11 // pred_region
          _
        $region52: #{tpu_custom_call.1} parent=11 // pred_fallthru
          _
        // Predicated region
        $region53: #{tpu_custom_call.1} parent=11 // pred_check
          %p427 = pneg %p322
        $region54: #{tpu_custom_call.1} parent=11 // pred_check_branch
          %429 = sbr.rel (%p427) target = $region56
        $region55: #{tpu_custom_call.1} parent=11 // pred_region
          _
        $region56: #{tpu_custom_call.1} parent=11 // pred_fallthru
          _
        // Predicated region
        $region57: #{tpu_custom_call.1} parent=11 // pred_check
          %p430 = pneg %p343
        $region58: #{tpu_custom_call.1} parent=11 // pred_check_branch
          %432 = sbr.rel (%p430) target = $region60
        $region59: #{tpu_custom_call.1} parent=11 // pred_region
          _
        $region60: #{tpu_custom_call.1} parent=11 // pred_fallthru
          _
      $region12: #{tpu_custom_call.1} parent=5 // pred_fallthru
        _
      %p433 = scmp.lt.s32.totalorder %s27, 2
      // Predicated region
      $region61: #{tpu_custom_call.1} parent=5 // pred_check
        %p434 = pneg %p433
      $region62: #{tpu_custom_call.1} parent=5 // pred_check_branch
        %436 = sbr.rel (%p434) target = $region64
      $region63: #{tpu_custom_call.1} parent=5 // pred_region
        // Predicated region
        $region65: #{tpu_custom_call.1} parent=63 // pred_check
          %p437 = pneg %p59
        $region66: #{tpu_custom_call.1} parent=63 // pred_check_branch
          %439 = sbr.rel (%p437) target = $region68
        $region67: #{tpu_custom_call.1} parent=63 // pred_region
          %p440 = scmp.lt.s32.totalorder %s34, 1
          %s441 = scalar_select %p440, %s34, 1
          %s442 = smul.addr %s441, 8
          %s443 = scalar_lea.vmem %s0, %s442
        $region68: #{tpu_custom_call.1} parent=63 // pred_fallthru
          _
        // Predicated region
        $region69: #{tpu_custom_call.1} parent=63 // pred_check
          %p444 = pneg %p85
        $region70: #{tpu_custom_call.1} parent=63 // pred_check_branch
          %446 = sbr.rel (%p444) target = $region72
        $region71: #{tpu_custom_call.1} parent=63 // pred_region
          %s447 = sand.u32 %s75, 1
          %s448 = scalar_lea.sflag [#allocation6], %s447
          %s449 = sand.u32 %s75, 1
          %s450 = scalar_lea.vmem [#allocation5], %s449
          %452 = vsyncadd %s448, 0
          %s453 = scalar_lea.hbm %s1, %s34
          %s455 = sshll.u32 %s453, 4
          %s456 = int_to_ptr.hbm [resolvable:$true] %s455
          %s457 = sshll.u32 %s450, 4
          %s458 = int_to_ptr.vmem [resolvable:$true] %s457
          %460 = dma.hbm_to_vmem [thread:$0]  %s456, 16, %s458, %s448
        $region72: #{tpu_custom_call.1} parent=63 // pred_fallthru
          _
      $region64: #{tpu_custom_call.1} parent=5 // pred_fallthru
        _
      %p461 = scmp.le.s32.totalorder 1, %s27
      %p462 = scmp.lt.s32.totalorder %s27, 3
      %p463 = pnand %p461, %p462
      %p464 = pneg %p463
      // Predicated region
      $region73: #{tpu_custom_call.1} parent=5 // pred_check
        _
      $region74: #{tpu_custom_call.1} parent=5 // pred_check_branch
        %466 = sbr.rel (%p463) target = $region76
      $region75: #{tpu_custom_call.1} parent=5 // pred_region
        %s467 = ssub.s32 %s27, 1
        %s468 = sand.u32 %s78, 1
        %s469 = scalar_lea.sflag [#allocation6], %s468
        %s470 = sand.u32 %s78, 1
        %s471 = scalar_lea.vmem [#allocation5], %s470
        // Predicated region
        $region77: #{tpu_custom_call.1} parent=75 // pred_check
          %p472 = pneg %p91
        $region78: #{tpu_custom_call.1} parent=75 // pred_check_branch
          %474 = sbr.rel (%p472) target = $region80
        $region79: #{tpu_custom_call.1} parent=75 // pred_region
          %476 = dma.done %s469, 16
        $region80: #{tpu_custom_call.1} parent=75 // pred_fallthru
          _
        // Predicated region
        $region81: #{tpu_custom_call.1} parent=75 // pred_check
          %p477 = pneg %p238
        $region82: #{tpu_custom_call.1} parent=75 // pred_check_branch
          %479 = sbr.rel (%p477) target = $region84
        $region83: #{tpu_custom_call.1} parent=75 // pred_region
          %481 = dma.done [#allocation9], 256
        $region84: #{tpu_custom_call.1} parent=75 // pred_fallthru
          _
        %p482 = scmp.lt.s32.totalorder %s36, 1
        %s483 = scalar_select %p482, %s36, 1
        %s484 = smul.addr %s483, 8
        %s485 = scalar_lea.vmem %s0, %s484
        %p486 = pneg %p65
        %p487 = pneg %p62
        %s488 = sand.u32 %s78, 1
        %s489 = scalar_lea.sflag [#allocation6], %s488
        %s490 = sand.u32 %s78, 1
        %s491 = scalar_lea.vmem [#allocation5], %s490
        %p492 = pneg %p91
        %p493 = pneg %p88
        %p494 = pneg %p112
        %p495 = pneg %p109
        %p496 = pneg %p133
        %p497 = pneg %p130
        %p498 = pneg %p154
        %p499 = pneg %p151
        %p500 = pneg %p175
        %p501 = pneg %p172
        %p502 = pneg %p196
        %p503 = pneg %p193
        %p504 = pneg %p217
        %p505 = pneg %p214
        %p506 = pneg %p238
        %p507 = pneg %p235
        %p508 = pneg %p259
        %p509 = pneg %p256
        %p510 = pneg %p280
        %p511 = pneg %p277
        %p512 = pneg %p301
        %p513 = pneg %p298
        %p514 = pneg %p322
        %p515 = pneg %p319
        %p516 = pneg %p343
        %p517 = pneg %p340
        %p518 = pneg %p371
        %p519 = pneg %p368
        %s520 = sand.u32 %s358, 1
        %s521 = scalar_lea.sflag [#allocation7], %s520
        %s522 = sand.u32 %s358, 1
        %s523 = smul.addr %s522, 8
        %s524 = scalar_lea.vmem [#allocation10], %s523
        %p525 = scmp.lt.s32.totalorder %s36, 1
        %s526 = scalar_select %p525, %s36, 1
        %s527 = smul.addr %s526, 8
        %s528 = scalar_lea.vmem %s0, %s527
        %p530 = scmp.eq.s32.totalorder %s37, 0
        // Predicated region
        $region85: #{tpu_custom_call.1} parent=75 // pred_check
          %p531 = pneg %p530
        $region86: #{tpu_custom_call.1} parent=75 // pred_check_branch
          %533 = sbr.rel (%p531) target = $region88
        $region87: #{tpu_custom_call.1} parent=75 // pred_region
          %v534 = vld [vmem:[%s528] sm:$0xff]
          %v535 = vpack.c.bf16 %v534, %v534
          %v536 = vld [vmem:[%s2] sm:$0xf]
          %v537 = vld [vmem:[%s2 + $0x4] sm:$0xf]
          %v538 = vld [vmem:[%s2 + $0x8] sm:$0xf]
          %v539 = vld [vmem:[%s2 + $0xc] sm:$0xf]
          %v540 = vld [vmem:[%s3] sm:$0x1]
          %v542 = vperm.slane %v540, 0
          %v548 = vunpack.c.l.b16 %v536
          %v549 = vunpack.c.l.b16 %v537
          %v550 = vunpack.c.l.b16 %v538
          %v551 = vunpack.c.l.b16 %v539
          %v552 = vpack.c.b16 %v549, %v548
          %v553 = vpack.c.b16 %v551, %v550
          %vm556 = vcmask 261120
          %v558 = vsel %vm556, %v535, 0
          %560 = vmatpush.bf16.msra.mxu0 0
          %561 = vmatpush.bf16.msra.mxu0 0
          %562 = vmatpush.bf16.msra.mxu0 0
          %563 = vmatpush.bf16.msra.mxu0 0
          %564 = vmatpush.bf16.msra.mxu0 0
          %565 = vmatpush.bf16.msra.mxu0 0
          %566 = vmatpush.bf16.msra.mxu0 %v553
          %567 = vmatpush.bf16.msra.mxu0 %v552
          %568 = vmatmul.bf16.gmra.mxu0 %v558
          %v569 = vpop.f32.mrf.mxu0
          %v570 = vadd.f32 %v542, %v569
          %v571 = vpop.f32.mrf.mxu0
          %572 = vdwg.mxu0
          %v573 = vpack.c.bf16 %v570, %v570
          %575 = vrot.lane.b32.xlu0 %v573, 120
          %v576 = vpop.permute.xlu0 %575
          %577 = vrot.lane.b32.xlu0 %v573, 112
          %v578 = vpop.permute.xlu0 %577
          %579 = vrot.lane.b32.xlu0 %v573, 104
          %v580 = vpop.permute.xlu0 %579
          %v583 = vpack.i.b16 %v576, %v573
          %v584 = vshrl.u32 %v573, 16
          %v585 = vshrl.u32 %v576, 16
          %v586 = vpack.i.b16 %v585, %v584
          %v589 = vpack.i.b16 %v580, %v578
          %v590 = vshrl.u32 %v578, 16
          %v591 = vshrl.u32 %v580, 16
          %v592 = vpack.i.b16 %v591, %v590
          %v595 = vunpack.c.l.s4 1983009808
          %v596 = vunpack.c.0.s8 %v595
          %v597 = vperm.slane %v583, %v596
          %v600 = vunpack.c.l.s4 1983009808
          %v601 = vunpack.c.0.s8 %v600
          %v602 = vperm.slane %v589, %v601
          %v603 = vrot.slane %v602, 4
          %vm604 = vcmask 1047556
          %v605 = vsel %vm604, %v603, %v597
          %v606 = vrot.slane %v597, 4
          %v607 = vsel %vm604, %v602, %v606
          %v609 = vunpack.c.l.s4 1934713408
          %v610 = vunpack.c.0.s8 %v609
          %v611 = vperm.slane %v605, %v610
          %v613 = vunpack.c.l.s4 1934713408
          %v614 = vunpack.c.0.s8 %v613
          %v615 = vperm.slane %v607, %v614
          %v616 = vrot.slane %v611, 4
          %v617 = vsel %vm604, 0, %v616
          %v618 = vrot.slane %v615, 4
          %v619 = vsel %vm604, 0, %v618
          %v622 = vunpack.c.l.s4 1983009808
          %v623 = vunpack.c.0.s8 %v622
          %v624 = vperm.slane %v586, %v623
          %v627 = vunpack.c.l.s4 1983009808
          %v628 = vunpack.c.0.s8 %v627
          %v629 = vperm.slane %v592, %v628
          %v630 = vrot.slane %v629, 4
          %v631 = vsel %vm604, %v630, %v624
          %v632 = vrot.slane %v624, 4
          %v633 = vsel %vm604, %v629, %v632
          %v635 = vunpack.c.l.s4 1934713408
          %v636 = vunpack.c.0.s8 %v635
          %v637 = vperm.slane %v631, %v636
          %v639 = vunpack.c.l.s4 1934713408
          %v640 = vunpack.c.0.s8 %v639
          %v641 = vperm.slane %v633, %v640
          %v642 = vrot.slane %v637, 4
          %v643 = vsel %vm604, 0, %v642
          %v644 = vrot.slane %v641, 4
          %v645 = vsel %vm604, 0, %v644
          %v646 = vsel %vm604, %v618, %v611
          %v648 = vunpack.c.l.s4 1983009808
          %v649 = vunpack.c.0.s8 %v648
          %v650 = vperm.slane %v646, %v649
          %v651 = vrot.slane %v619, 4
          %v652 = vsel %vm604, %v651, %v617
          %v654 = vunpack.c.l.s4 1983009808
          %v655 = vunpack.c.0.s8 %v654
          %v656 = vperm.slane %v652, %v655
          %v657 = vrot.slane %v656, 4
          %v658 = vsel %vm604, %v657, %v650
          %v660 = vunpack.c.l.s4 1934713408
          %v661 = vunpack.c.0.s8 %v660
          %v662 = vperm.slane %v658, %v661
          %v663 = vrot.slane %v662, 4
          %v664 = vsel %vm604, 0, %v663
          %v665 = vsel %vm604, %v644, %v637
          %v667 = vunpack.c.l.s4 1983009808
          %v668 = vunpack.c.0.s8 %v667
          %v669 = vperm.slane %v665, %v668
          %v670 = vrot.slane %v645, 4
          %v671 = vsel %vm604, %v670, %v643
          %v673 = vunpack.c.l.s4 1983009808
          %v674 = vunpack.c.0.s8 %v673
          %v675 = vperm.slane %v671, %v674
          %v676 = vrot.slane %v675, 4
          %v677 = vsel %vm604, %v676, %v669
          %v679 = vunpack.c.l.s4 1934713408
          %v680 = vunpack.c.0.s8 %v679
          %v681 = vperm.slane %v677, %v680
          %v682 = vrot.slane %v681, 4
          %v683 = vsel %vm604, 0, %v682
          %v686 = vpack.i.b16 %v681, %v662
          %v688 = vshrl.u32 %v662, 16
          %v689 = vshrl.u32 %v681, 16
          %v690 = vpack.i.b16 %v689, %v688
          %v694 = vpack.i.b16 %v683, %v664
          %v696 = vshrl.u32 %v664, 16
          %v697 = vshrl.u32 %v683, 16
          %v698 = vpack.i.b16 %v697, %v696
          %vm700 = vcmask 60416
          %701 = vst.msk [vmem:[#allocation2] sm:$0xf] %vm700, %v686
          %702 = vst.msk [vmem:[#allocation2 + $0x4] sm:$0xf] %vm700, %v690
          %703 = vst.msk [vmem:[#allocation2 + $0x8] sm:$0xf] %vm700, %v694
          %704 = vst.msk [vmem:[#allocation2 + $0xc] sm:$0xf] %vm700, %v698
          %705 = vrot.lane.b32.xlu0 %v573, 96
          %v706 = vpop.permute.xlu0 %705
          %707 = vrot.lane.b32.xlu0 %v576, 96
          %v708 = vpop.permute.xlu0 %707
          %709 = vrot.lane.b32.xlu0 %v578, 96
          %v710 = vpop.permute.xlu0 %709
          %711 = vrot.lane.b32.xlu0 %v580, 96
          %v712 = vpop.permute.xlu0 %711
          %v715 = vpack.i.b16 %v708, %v706
          %v716 = vshrl.u32 %v706, 16
          %v717 = vshrl.u32 %v708, 16
          %v718 = vpack.i.b16 %v717, %v716
          %v721 = vpack.i.b16 %v712, %v710
          %v722 = vshrl.u32 %v710, 16
          %v723 = vshrl.u32 %v712, 16
          %v724 = vpack.i.b16 %v723, %v722
          %v727 = vunpack.c.l.s4 1983009808
          %v728 = vunpack.c.0.s8 %v727
          %v729 = vperm.slane %v715, %v728
          %v732 = vunpack.c.l.s4 1983009808
          %v733 = vunpack.c.0.s8 %v732
          %v734 = vperm.slane %v721, %v733
          %v735 = vrot.slane %v734, 4
          %v736 = vsel %vm604, %v735, %v729
          %v737 = vrot.slane %v729, 4
          %v738 = vsel %vm604, %v734, %v737
          %v740 = vunpack.c.l.s4 1934713408
          %v741 = vunpack.c.0.s8 %v740
          %v742 = vperm.slane %v736, %v741
          %v744 = vunpack.c.l.s4 1934713408
          %v745 = vunpack.c.0.s8 %v744
          %v746 = vperm.slane %v738, %v745
          %v747 = vrot.slane %v742, 4
          %v748 = vsel %vm604, 0, %v747
          %v749 = vrot.slane %v746, 4
          %v750 = vsel %vm604, 0, %v749
          %v753 = vunpack.c.l.s4 1983009808
          %v754 = vunpack.c.0.s8 %v753
          %v755 = vperm.slane %v718, %v754
          %v758 = vunpack.c.l.s4 1983009808
          %v759 = vunpack.c.0.s8 %v758
          %v760 = vperm.slane %v724, %v759
          %v761 = vrot.slane %v760, 4
          %v762 = vsel %vm604, %v761, %v755
          %v763 = vrot.slane %v755, 4
          %v764 = vsel %vm604, %v760, %v763
          %v766 = vunpack.c.l.s4 1934713408
          %v767 = vunpack.c.0.s8 %v766
          %v768 = vperm.slane %v762, %v767
          %v770 = vunpack.c.l.s4 1934713408
          %v771 = vunpack.c.0.s8 %v770
          %v772 = vperm.slane %v764, %v771
          %v773 = vrot.slane %v768, 4
          %v774 = vsel %vm604, 0, %v773
          %v775 = vrot.slane %v772, 4
          %v776 = vsel %vm604, 0, %v775
          %v777 = vsel %vm604, %v749, %v742
          %v779 = vunpack.c.l.s4 1983009808
          %v780 = vunpack.c.0.s8 %v779
          %v781 = vperm.slane %v777, %v780
          %v782 = vrot.slane %v750, 4
          %v783 = vsel %vm604, %v782, %v748
          %v785 = vunpack.c.l.s4 1983009808
          %v786 = vunpack.c.0.s8 %v785
          %v787 = vperm.slane %v783, %v786
          %v788 = vrot.slane %v787, 4
          %v789 = vsel %vm604, %v788, %v781
          %v791 = vunpack.c.l.s4 1934713408
          %v792 = vunpack.c.0.s8 %v791
          %v793 = vperm.slane %v789, %v792
          %v794 = vrot.slane %v793, 4
          %v795 = vsel %vm604, 0, %v794
          %v796 = vsel %vm604, %v775, %v768
          %v798 = vunpack.c.l.s4 1983009808
          %v799 = vunpack.c.0.s8 %v798
          %v800 = vperm.slane %v796, %v799
          %v801 = vrot.slane %v776, 4
          %v802 = vsel %vm604, %v801, %v774
          %v804 = vunpack.c.l.s4 1983009808
          %v805 = vunpack.c.0.s8 %v804
          %v806 = vperm.slane %v802, %v805
          %v807 = vrot.slane %v806, 4
          %v808 = vsel %vm604, %v807, %v800
          %v810 = vunpack.c.l.s4 1934713408
          %v811 = vunpack.c.0.s8 %v810
          %v812 = vperm.slane %v808, %v811
          %v813 = vrot.slane %v812, 4
          %v814 = vsel %vm604, 0, %v813
          %v817 = vpack.i.b16 %v812, %v793
          %v819 = vshrl.u32 %v793, 16
          %v820 = vshrl.u32 %v812, 16
          %v821 = vpack.i.b16 %v820, %v819
          %v825 = vpack.i.b16 %v814, %v795
          %v827 = vshrl.u32 %v795, 16
          %v828 = vshrl.u32 %v814, 16
          %v829 = vpack.i.b16 %v828, %v827
          %831 = vst.msk [vmem:[#allocation3] sm:$0xf] %vm700, %v817
          %832 = vst.msk [vmem:[#allocation3 + $0x4] sm:$0xf] %vm700, %v821
          %833 = vst.msk [vmem:[#allocation3 + $0x8] sm:$0xf] %vm700, %v825
          %834 = vst.msk [vmem:[#allocation3 + $0xc] sm:$0xf] %vm700, %v829
          %835 = vrot.lane.b32.xlu0 %v573, 64
          %v836 = vpop.permute.xlu0 %835
          %837 = vrot.lane.b32.xlu0 %v576, 64
          %v838 = vpop.permute.xlu0 %837
          %839 = vrot.lane.b32.xlu0 %v578, 64
          %v840 = vpop.permute.xlu0 %839
          %841 = vrot.lane.b32.xlu0 %v580, 64
          %v842 = vpop.permute.xlu0 %841
          %v845 = vpack.i.b16 %v838, %v836
          %v846 = vshrl.u32 %v836, 16
          %v847 = vshrl.u32 %v838, 16
          %v848 = vpack.i.b16 %v847, %v846
          %v851 = vpack.i.b16 %v842, %v840
          %v852 = vshrl.u32 %v840, 16
          %v853 = vshrl.u32 %v842, 16
          %v854 = vpack.i.b16 %v853, %v852
          %v857 = vunpack.c.l.s4 1983009808
          %v858 = vunpack.c.0.s8 %v857
          %v859 = vperm.slane %v845, %v858
          %v862 = vunpack.c.l.s4 1983009808
          %v863 = vunpack.c.0.s8 %v862
          %v864 = vperm.slane %v851, %v863
          %v865 = vrot.slane %v864, 4
          %v866 = vsel %vm604, %v865, %v859
          %v867 = vrot.slane %v859, 4
          %v868 = vsel %vm604, %v864, %v867
          %v870 = vunpack.c.l.s4 1934713408
          %v871 = vunpack.c.0.s8 %v870
          %v872 = vperm.slane %v866, %v871
          %v874 = vunpack.c.l.s4 1934713408
          %v875 = vunpack.c.0.s8 %v874
          %v876 = vperm.slane %v868, %v875
          %v877 = vrot.slane %v872, 4
          %v878 = vsel %vm604, 0, %v877
          %v879 = vrot.slane %v876, 4
          %v880 = vsel %vm604, 0, %v879
          %v883 = vunpack.c.l.s4 1983009808
          %v884 = vunpack.c.0.s8 %v883
          %v885 = vperm.slane %v848, %v884
          %v888 = vunpack.c.l.s4 1983009808
          %v889 = vunpack.c.0.s8 %v888
          %v890 = vperm.slane %v854, %v889
          %v891 = vrot.slane %v890, 4
          %v892 = vsel %vm604, %v891, %v885
          %v893 = vrot.slane %v885, 4
          %v894 = vsel %vm604, %v890, %v893
          %v896 = vunpack.c.l.s4 1934713408
          %v897 = vunpack.c.0.s8 %v896
          %v898 = vperm.slane %v892, %v897
          %v900 = vunpack.c.l.s4 1934713408
          %v901 = vunpack.c.0.s8 %v900
          %v902 = vperm.slane %v894, %v901
          %v903 = vrot.slane %v898, 4
          %v904 = vsel %vm604, 0, %v903
          %v905 = vrot.slane %v902, 4
          %v906 = vsel %vm604, 0, %v905
          %v907 = vsel %vm604, %v879, %v872
          %v909 = vunpack.c.l.s4 1983009808
          %v910 = vunpack.c.0.s8 %v909
          %v911 = vperm.slane %v907, %v910
          %v912 = vrot.slane %v880, 4
          %v913 = vsel %vm604, %v912, %v878
          %v915 = vunpack.c.l.s4 1983009808
          %v916 = vunpack.c.0.s8 %v915
          %v917 = vperm.slane %v913, %v916
          %v918 = vrot.slane %v917, 4
          %v919 = vsel %vm604, %v918, %v911
          %v921 = vunpack.c.l.s4 1934713408
          %v922 = vunpack.c.0.s8 %v921
          %v923 = vperm.slane %v919, %v922
          %v924 = vrot.slane %v923, 4
          %v925 = vsel %vm604, 0, %v924
          %v926 = vsel %vm604, %v905, %v898
          %v928 = vunpack.c.l.s4 1983009808
          %v929 = vunpack.c.0.s8 %v928
          %v930 = vperm.slane %v926, %v929
          %v931 = vrot.slane %v906, 4
          %v932 = vsel %vm604, %v931, %v904
          %v934 = vunpack.c.l.s4 1983009808
          %v935 = vunpack.c.0.s8 %v934
          %v936 = vperm.slane %v932, %v935
          %v937 = vrot.slane %v936, 4
          %v938 = vsel %vm604, %v937, %v930
          %v940 = vunpack.c.l.s4 1934713408
          %v941 = vunpack.c.0.s8 %v940
          %v942 = vperm.slane %v938, %v941
          %v943 = vrot.slane %v942, 4
          %v944 = vsel %vm604, 0, %v943
          %v947 = vpack.i.b16 %v942, %v923
          %v949 = vshrl.u32 %v923, 16
          %v950 = vshrl.u32 %v942, 16
          %v951 = vpack.i.b16 %v950, %v949
          %v955 = vpack.i.b16 %v944, %v925
          %v957 = vshrl.u32 %v925, 16
          %v958 = vshrl.u32 %v944, 16
          %v959 = vpack.i.b16 %v958, %v957
          %961 = vst.msk [vmem:[#allocation4] sm:$0xf] %vm700, %v947
          %962 = vst.msk [vmem:[#allocation4 + $0x4] sm:$0xf] %vm700, %v951
          %963 = vst.msk [vmem:[#allocation4 + $0x8] sm:$0xf] %vm700, %v955
          %964 = vst.msk [vmem:[#allocation4 + $0xc] sm:$0xf] %vm700, %v959
        $region88: #{tpu_custom_call.1} parent=75 // pred_fallthru
          _
        %v965 = vld [vmem:[%s528] sm:$0xff]
        %v966 = vld [vmem:[%s471] sm:$0x1]
        %v967 = vld [vmem:[#allocation2] sm:$0xf]
        %v968 = vld [vmem:[#allocation2 + $0x4] sm:$0xf]
        %v969 = vld [vmem:[#allocation2 + $0x8] sm:$0xf]
        %v970 = vld [vmem:[#allocation2 + $0xc] sm:$0xf]
        %v971 = vld [vmem:[#allocation3] sm:$0xf]
        %v972 = vld [vmem:[#allocation3 + $0x4] sm:$0xf]
        %v973 = vld [vmem:[#allocation3 + $0x8] sm:$0xf]
        %v974 = vld [vmem:[#allocation3 + $0xc] sm:$0xf]
        %v975 = vld [vmem:[#allocation4] sm:$0xf]
        %v976 = vld [vmem:[#allocation4 + $0x4] sm:$0xf]
        %v977 = vld [vmem:[#allocation4 + $0x8] sm:$0xf]
        %v978 = vld [vmem:[#allocation4 + $0xc] sm:$0xf]
        %v980 = vperm.slane %v966, 0
        %vm982 = vcmask 64512
        %v984 = vsel %vm982, %v967, 0
        %v987 = vsel %vm982, %v971, 0
        %989 = vmatpush.bf16.xpose.msra.mxu0 0
        %990 = vmatpush.bf16.xpose.msra.mxu0 0
        %991 = vmatpush.bf16.xpose.msra.mxu0 0
        %992 = vmatpush.bf16.xpose.msra.mxu0 0
        %993 = vmatpush.bf16.xpose.msra.mxu0 0
        %994 = vmatpush.bf16.xpose.msra.mxu0 0
        %995 = vmatpush.bf16.xpose.msra.mxu0 0
        %996 = vmatpush.bf16.xpose.msra.mxu0 %v987
        %997 = vmatmul.bf16.gmra.mxu0 %v984
        %v998 = vpop.f32.mrf.mxu0
        %v999 = vadd.f32 %v980, %v998
        %v1000 = vpop.f32.mrf.mxu0
        %1001 = vdwg.mxu0
        %v1003 = vsel %vm982, %v968, 0
        %v1006 = vsel %vm982, %v972, 0
        %1008 = vmatpush.bf16.xpose.msra.mxu0 0
        %1009 = vmatpush.bf16.xpose.msra.mxu0 0
        %1010 = vmatpush.bf16.xpose.msra.mxu0 0
        %1011 = vmatpush.bf16.xpose.msra.mxu0 0
        %1012 = vmatpush.bf16.xpose.msra.mxu0 0
        %1013 = vmatpush.bf16.xpose.msra.mxu0 0
        %1014 = vmatpush.bf16.xpose.msra.mxu0 0
        %1015 = vmatpush.bf16.xpose.msra.mxu0 %v1006
        %1016 = vmatmul.bf16.gmra.mxu0 %v1003
        %v1017 = vpop.f32.mrf.mxu0
        %v1018 = vadd.f32 %v980, %v1017
        %v1019 = vpop.f32.mrf.mxu0
        %1020 = vdwg.mxu0
        %v1022 = vsel %vm982, %v969, 0
        %v1025 = vsel %vm982, %v973, 0
        %1027 = vmatpush.bf16.xpose.msra.mxu0 0
        %1028 = vmatpush.bf16.xpose.msra.mxu0 0
        %1029 = vmatpush.bf16.xpose.msra.mxu0 0
        %1030 = vmatpush.bf16.xpose.msra.mxu0 0
        %1031 = vmatpush.bf16.xpose.msra.mxu0 0
        %1032 = vmatpush.bf16.xpose.msra.mxu0 0
        %1033 = vmatpush.bf16.xpose.msra.mxu0 0
        %1034 = vmatpush.bf16.xpose.msra.mxu0 %v1025
        %1035 = vmatmul.bf16.gmra.mxu0 %v1022
        %v1036 = vpop.f32.mrf.mxu0
        %v1037 = vadd.f32 %v980, %v1036
        %v1038 = vpop.f32.mrf.mxu0
        %1039 = vdwg.mxu0
        %v1041 = vsel %vm982, %v970, 0
        %v1044 = vsel %vm982, %v974, 0
        %1046 = vmatpush.bf16.xpose.msra.mxu0 0
        %1047 = vmatpush.bf16.xpose.msra.mxu0 0
        %1048 = vmatpush.bf16.xpose.msra.mxu0 0
        %1049 = vmatpush.bf16.xpose.msra.mxu0 0
        %1050 = vmatpush.bf16.xpose.msra.mxu0 0
        %1051 = vmatpush.bf16.xpose.msra.mxu0 0
        %1052 = vmatpush.bf16.xpose.msra.mxu0 0
        %1053 = vmatpush.bf16.xpose.msra.mxu0 %v1044
        %1054 = vmatmul.bf16.gmra.mxu0 %v1041
        %v1055 = vpop.f32.mrf.mxu0
        %v1056 = vadd.f32 %v980, %v1055
        %v1057 = vpop.f32.mrf.mxu0
        %1058 = vdwg.mxu0
        %v1059 = vsel %vm982, %v999, -inf
        %1060 = vmax.xlane.f32.xlu0 %v1059
        %v1061 = vpop.xlane.xlu0 %1060
        %v1062 = vsel %vm982, %v1018, -inf
        %1063 = vmax.xlane.f32.xlu0 %v1062
        %v1064 = vpop.xlane.xlu0 %1063
        %v1065 = vsel %vm982, %v1037, -inf
        %1066 = vmax.xlane.f32.xlu0 %v1065
        %v1067 = vpop.xlane.xlu0 %1066
        %v1068 = vsel %vm982, %v1056, -inf
        %1069 = vmax.xlane.f32.xlu0 %v1068
        %v1070 = vpop.xlane.xlu0 %1069
        %v1071 = vsub.f32 %v999, %v1061
        %v1072 = vsub.f32 %v1018, %v1064
        %v1073 = vsub.f32 %v1037, %v1067
        %v1074 = vsub.f32 %v1056, %v1070
        %v1075 = vmul.f32 %v1071, 1.442695
        %v1076 = vpow.pop %v1075
        %v1077 = vmul.f32 %v1072, 1.442695
        %v1078 = vpow.pop %v1077
        %v1079 = vmul.f32 %v1073, 1.442695
        %v1080 = vpow.pop %v1079
        %v1081 = vmul.f32 %v1074, 1.442695
        %v1082 = vpow.pop %v1081
        %v1083 = vsel %vm982, %v1076, 0.0
        %1084 = vadd.xlane.f32.xlu0 %v1083
        %v1085 = vpop.xlane.xlu0 %1084
        %v1086 = vsel %vm982, %v1078, 0.0
        %1087 = vadd.xlane.f32.xlu0 %v1086
        %v1088 = vpop.xlane.xlu0 %1087
        %v1089 = vsel %vm982, %v1080, 0.0
        %1090 = vadd.xlane.f32.xlu0 %v1089
        %v1091 = vpop.xlane.xlu0 %1090
        %v1092 = vsel %vm982, %v1082, 0.0
        %1093 = vadd.xlane.f32.xlu0 %v1092
        %v1094 = vpop.xlane.xlu0 %1093
        %v1095 = vrcp.pop %v1085
        %v1096 = vrcp.pop %v1088
        %v1097 = vrcp.pop %v1091
        %v1098 = vrcp.pop %v1094
        %v1099 = vmul.f32 %v1076, %v1095
        %v1100 = vmul.f32 %v1078, %v1096
        %v1101 = vmul.f32 %v1080, %v1097
        %v1102 = vmul.f32 %v1082, %v1098
        %v1103 = vpack.c.bf16 %v1099, %v1099
        %v1104 = vpack.c.bf16 %v1100, %v1100
        %v1105 = vpack.c.bf16 %v1101, %v1101
        %v1106 = vpack.c.bf16 %v1102, %v1102
        %v1108 = vsel %vm982, %v1103, 0
        %vm1110 = vcmask 1043456
        %v1112 = vsel %vm1110, %v975, 0
        %1114 = vmatpush.bf16.msra.mxu0 0
        %1115 = vmatpush.bf16.msra.mxu0 0
        %1116 = vmatpush.bf16.msra.mxu0 0
        %1117 = vmatpush.bf16.msra.mxu0 0
        %1118 = vmatpush.bf16.msra.mxu0 0
        %1119 = vmatpush.bf16.msra.mxu0 0
        %1120 = vmatpush.bf16.msra.mxu0 0
        %1121 = vmatpush.bf16.msra.mxu0 %v1112
        %1122 = vmatmul.bf16.gmra.mxu0 %v1108
        %v1123 = vpop.f32.mrf.mxu0
        %v1124 = vadd.f32 0.0, %v1123
        %v1125 = vpop.f32.mrf.mxu0
        %1126 = vdwg.mxu0
        %v1128 = vsel %vm982, %v1104, 0
        %v1131 = vsel %vm1110, %v976, 0
        %1133 = vmatpush.bf16.msra.mxu0 0
        %1134 = vmatpush.bf16.msra.mxu0 0
        %1135 = vmatpush.bf16.msra.mxu0 0
        %1136 = vmatpush.bf16.msra.mxu0 0
        %1137 = vmatpush.bf16.msra.mxu0 0
        %1138 = vmatpush.bf16.msra.mxu0 0
        %1139 = vmatpush.bf16.msra.mxu0 0
        %1140 = vmatpush.bf16.msra.mxu0 %v1131
        %1141 = vmatmul.bf16.gmra.mxu0 %v1128
        %v1142 = vpop.f32.mrf.mxu0
        %v1143 = vadd.f32 0.0, %v1142
        %v1144 = vpop.f32.mrf.mxu0
        %1145 = vdwg.mxu0
        %v1147 = vsel %vm982, %v1105, 0
        %v1150 = vsel %vm1110, %v977, 0
        %1152 = vmatpush.bf16.msra.mxu0 0
        %1153 = vmatpush.bf16.msra.mxu0 0
        %1154 = vmatpush.bf16.msra.mxu0 0
        %1155 = vmatpush.bf16.msra.mxu0 0
        %1156 = vmatpush.bf16.msra.mxu0 0
        %1157 = vmatpush.bf16.msra.mxu0 0
        %1158 = vmatpush.bf16.msra.mxu0 0
        %1159 = vmatpush.bf16.msra.mxu0 %v1150
        %1160 = vmatmul.bf16.gmra.mxu0 %v1147
        %v1161 = vpop.f32.mrf.mxu0
        %v1162 = vadd.f32 0.0, %v1161
        %v1163 = vpop.f32.mrf.mxu0
        %1164 = vdwg.mxu0
        %v1166 = vsel %vm982, %v1106, 0
        %v1169 = vsel %vm1110, %v978, 0
        %1171 = vmatpush.bf16.msra.mxu0 0
        %1172 = vmatpush.bf16.msra.mxu0 0
        %1173 = vmatpush.bf16.msra.mxu0 0
        %1174 = vmatpush.bf16.msra.mxu0 0
        %1175 = vmatpush.bf16.msra.mxu0 0
        %1176 = vmatpush.bf16.msra.mxu0 0
        %1177 = vmatpush.bf16.msra.mxu0 0
        %1178 = vmatpush.bf16.msra.mxu0 %v1169
        %1179 = vmatmul.bf16.gmra.mxu0 %v1166
        %v1180 = vpop.f32.mrf.mxu0
        %v1181 = vadd.f32 0.0, %v1180
        %v1182 = vpop.f32.mrf.mxu0
        %1183 = vdwg.mxu0
        %v1184 = vpack.c.bf16 %v1124, %v1124
        %v1185 = vpack.c.bf16 %v1143, %v1143
        %v1186 = vpack.c.bf16 %v1162, %v1162
        %v1187 = vpack.c.bf16 %v1181, %v1181
        %v1190 = vpack.i.b16 %v1185, %v1184
        %v1191 = vshrl.u32 %v1184, 16
        %v1192 = vshrl.u32 %v1185, 16
        %v1193 = vpack.i.b16 %v1192, %v1191
        %v1196 = vpack.i.b16 %v1187, %v1186
        %v1197 = vshrl.u32 %v1186, 16
        %v1198 = vshrl.u32 %v1187, 16
        %v1199 = vpack.i.b16 %v1198, %v1197
        %v1202 = vunpack.c.l.s4 1983009808
        %v1203 = vunpack.c.0.s8 %v1202
        %v1204 = vperm.slane %v1190, %v1203
        %v1207 = vunpack.c.l.s4 1983009808
        %v1208 = vunpack.c.0.s8 %v1207
        %v1209 = vperm.slane %v1196, %v1208
        %v1210 = vrot.slane %v1209, 4
        %vm1211 = vcmask 1047556
        %v1212 = vsel %vm1211, %v1210, %v1204
        %v1213 = vrot.slane %v1204, 4
        %v1214 = vsel %vm1211, %v1209, %v1213
        %v1216 = vunpack.c.l.s4 1934713408
        %v1217 = vunpack.c.0.s8 %v1216
        %v1218 = vperm.slane %v1212, %v1217
        %v1220 = vunpack.c.l.s4 1934713408
        %v1221 = vunpack.c.0.s8 %v1220
        %v1222 = vperm.slane %v1214, %v1221
        %v1223 = vrot.slane %v1218, 4
        %v1224 = vsel %vm1211, 0, %v1223
        %v1225 = vrot.slane %v1222, 4
        %v1226 = vsel %vm1211, 0, %v1225
        %v1229 = vunpack.c.l.s4 1983009808
        %v1230 = vunpack.c.0.s8 %v1229
        %v1231 = vperm.slane %v1193, %v1230
        %v1234 = vunpack.c.l.s4 1983009808
        %v1235 = vunpack.c.0.s8 %v1234
        %v1236 = vperm.slane %v1199, %v1235
        %v1237 = vrot.slane %v1236, 4
        %v1238 = vsel %vm1211, %v1237, %v1231
        %v1239 = vrot.slane %v1231, 4
        %v1240 = vsel %vm1211, %v1236, %v1239
        %v1242 = vunpack.c.l.s4 1934713408
        %v1243 = vunpack.c.0.s8 %v1242
        %v1244 = vperm.slane %v1238, %v1243
        %v1246 = vunpack.c.l.s4 1934713408
        %v1247 = vunpack.c.0.s8 %v1246
        %v1248 = vperm.slane %v1240, %v1247
        %v1249 = vrot.slane %v1244, 4
        %v1250 = vsel %vm1211, 0, %v1249
        %v1251 = vrot.slane %v1248, 4
        %v1252 = vsel %vm1211, 0, %v1251
        %v1253 = vsel %vm1211, %v1225, %v1218
        %v1255 = vunpack.c.l.s4 1983009808
        %v1256 = vunpack.c.0.s8 %v1255
        %v1257 = vperm.slane %v1253, %v1256
        %v1258 = vrot.slane %v1226, 4
        %v1259 = vsel %vm1211, %v1258, %v1224
        %v1261 = vunpack.c.l.s4 1983009808
        %v1262 = vunpack.c.0.s8 %v1261
        %v1263 = vperm.slane %v1259, %v1262
        %v1264 = vrot.slane %v1263, 4
        %v1265 = vsel %vm1211, %v1264, %v1257
        %v1267 = vunpack.c.l.s4 1934713408
        %v1268 = vunpack.c.0.s8 %v1267
        %v1269 = vperm.slane %v1265, %v1268
        %v1270 = vrot.slane %v1269, 4
        %v1271 = vsel %vm1211, 0, %v1270
        %v1272 = vsel %vm1211, %v1251, %v1244
        %v1274 = vunpack.c.l.s4 1983009808
        %v1275 = vunpack.c.0.s8 %v1274
        %v1276 = vperm.slane %v1272, %v1275
        %v1277 = vrot.slane %v1252, 4
        %v1278 = vsel %vm1211, %v1277, %v1250
        %v1280 = vunpack.c.l.s4 1983009808
        %v1281 = vunpack.c.0.s8 %v1280
        %v1282 = vperm.slane %v1278, %v1281
        %v1283 = vrot.slane %v1282, 4
        %v1284 = vsel %vm1211, %v1283, %v1276
        %v1286 = vunpack.c.l.s4 1934713408
        %v1287 = vunpack.c.0.s8 %v1286
        %v1288 = vperm.slane %v1284, %v1287
        %v1289 = vrot.slane %v1288, 4
        %v1290 = vsel %vm1211, 0, %v1289
        %v1293 = vpack.i.b16 %v1288, %v1269
        %v1294 = vshrl.u32 %v1269, 16
        %v1295 = vshrl.u32 %v1288, 16
        %v1296 = vpack.i.b16 %v1295, %v1294
        %v1299 = vpack.i.b16 %v1290, %v1271
        %v1300 = vshrl.u32 %v1271, 16
        %v1301 = vshrl.u32 %v1290, 16
        %v1302 = vpack.i.b16 %v1301, %v1300
        %v1303 = vunpack.c.l.b16 %v1296
        %v1304 = vpack.c.b16 %v1303, %v1303
        %1305 = vrot.lane.b32.xlu0 %v1304, 8
        %v1306 = vpop.permute.xlu0 %1305
        %v1307 = vunpack.c.l.b16 %v1299
        %v1308 = vpack.c.b16 %v1307, %v1307
        %1309 = vrot.lane.b32.xlu0 %v1308, 16
        %v1310 = vpop.permute.xlu0 %1309
        %v1311 = vunpack.c.l.b16 %v1302
        %v1312 = vpack.c.b16 %v1311, %v1311
        %1313 = vrot.lane.b32.xlu0 %v1312, 24
        %v1314 = vpop.permute.xlu0 %1313
        %v1317 = vsel %vm982, %v1293, %v1306
        %vm1318 = vcmask 130048
        %v1320 = vsel %vm1318, %v1317, %v1310
        %vm1321 = vcmask 195584
        %v1323 = vsel %vm1321, %v1320, %v1314
        %v1324 = vld [vmem:[%s4] sm:$0xf]
        %v1325 = vld [vmem:[%s4 + $0x4] sm:$0xf]
        %v1326 = vld [vmem:[%s4 + $0x8] sm:$0xf]
        %v1327 = vld [vmem:[%s4 + $0xc] sm:$0xf]
        %v1328 = vld [vmem:[%s5] sm:$0x1]
        %v1330 = vperm.slane %v1328, 0
        %v1336 = vunpack.c.l.b16 %v1324
        %v1337 = vunpack.c.l.b16 %v1325
        %v1338 = vunpack.c.l.b16 %v1326
        %v1339 = vunpack.c.l.b16 %v1327
        %v1340 = vpack.c.b16 %v1337, %v1336
        %v1341 = vpack.c.b16 %v1339, %v1338
        %vm1344 = vcmask 261120
        %v1345 = vsel %vm1344, %v1323, 0
        %1347 = vmatpush.bf16.msra.mxu0 0
        %1348 = vmatpush.bf16.msra.mxu0 0
        %1349 = vmatpush.bf16.msra.mxu0 0
        %1350 = vmatpush.bf16.msra.mxu0 0
        %1351 = vmatpush.bf16.msra.mxu0 0
        %1352 = vmatpush.bf16.msra.mxu0 0
        %1353 = vmatpush.bf16.msra.mxu0 %v1341
        %1354 = vmatpush.bf16.msra.mxu0 %v1340
        %1355 = vmatmul.bf16.gmra.mxu0 %v1345
        %v1356 = vpop.f32.mrf.mxu0
        %v1357 = vadd.f32 %v1330, %v1356
        %v1358 = vpop.f32.mrf.mxu0
        %1359 = vdwg.mxu0
        %v1360 = vadd.f32 %v1357, %v965
        %v1361 = vsel %vm1344, %v1360, 0.0
        %1362 = vadd.xlane.f32.xlu0 %v1361
        %v1363 = vpop.xlane.xlu0 %1362
        %v1364 = vrcp.pop 32.0
        %v1365 = vmul.f32 32.0, %v1364
        %v1366 = vsub.f32 1.0, %v1365
        %v1367 = vmul.f32 %v1364, %v1366
        %v1368 = vadd.f32 %v1364, %v1367
        %vm1369 = vweird.f32 %v1364
        %v1370 = vsel %vm1369, %v1364, %v1368
        %v1371 = vmul.f32 %v1363, %v1370
        %v1372 = vsub.f32 %v1360, %v1371
        %v1373 = vmul.f32 %v1372, %v1372
        %v1374 = vsel %vm1344, %v1373, 0.0
        %1375 = vadd.xlane.f32.xlu0 %v1374
        %v1376 = vpop.xlane.xlu0 %1375
        %v1377 = vmul.f32 %v1376, %v1370
        %v1378 = vadd.f32 %v1377, 1e-12
        %v1379 = vrsqrt.pop %v1378
        %v1380 = vmul.f32 %v1379, %v1378
        %v1381 = vmul.f32 %v1380, %v1379
        %v1382 = vmul.f32 0.5, %v1381
        %v1383 = vsub.f32 1.5, %v1382
        %v1384 = vmul.f32 %v1379, %v1383
        %vm1385 = vweird.f32 %v1378
        %vm1386 = vweird.f32 %v1379
        %vm1387 = vmor %vm1385, %vm1386
        %v1388 = vsel %vm1387, %v1379, %v1384
        %v1389 = vmul.f32 %v1372, %v1388
        %v1390 = vld [vmem:[%s6] sm:$0x1]
        %v1392 = vperm.slane %v1390, 0
        %v1394 = vmul.f32 %v1389, %v1392
        %v1395 = vld [vmem:[%s7] sm:$0x1]
        %v1397 = vperm.slane %v1395, 0
        %v1399 = vadd.f32 %v1394, %v1397
        %v1400 = vpack.c.bf16 %v1399, %v1399
        %v1401 = vld [vmem:[#allocation8] sm:$0xf]
        %v1402 = vld [vmem:[#allocation8 + $0x4] sm:$0xf]
        %v1403 = vld [vmem:[#allocation8 + $0x8] sm:$0xf]
        %v1404 = vld [vmem:[#allocation8 + $0xc] sm:$0xf]
        %v1405 = vld [vmem:[%s9] sm:$0x1]
        %v1407 = vperm.slane %v1405, 0
        %v1413 = vunpack.c.l.b16 %v1401
        %v1414 = vunpack.c.l.b16 %v1402
        %v1415 = vunpack.c.l.b16 %v1403
        %v1416 = vunpack.c.l.b16 %v1404
        %v1417 = vpack.c.b16 %v1414, %v1413
        %v1418 = vpack.c.b16 %v1416, %v1415
        %v1422 = vsel %vm1344, %v1400, 0
        %1424 = vmatpush.bf16.msra.mxu0 0
        %1425 = vmatpush.bf16.msra.mxu0 0
        %1426 = vmatpush.bf16.msra.mxu0 0
        %1427 = vmatpush.bf16.msra.mxu0 0
        %1428 = vmatpush.bf16.msra.mxu0 0
        %1429 = vmatpush.bf16.msra.mxu0 0
        %1430 = vmatpush.bf16.msra.mxu0 %v1418
        %1431 = vmatpush.bf16.msra.mxu0 %v1417
        %1432 = vmatmul.bf16.gmra.mxu0 %v1422
        %v1433 = vpop.f32.mrf.mxu0
        %v1434 = vadd.f32 %v1407, %v1433
        %v1435 = vpop.f32.mrf.mxu0
        %1436 = vdwg.mxu0
        %v1437 = vmul.f32 %v1434, 0.5
        %v1438 = vmul.f32 %v1434, 0.70710677
        %v1439 = vmul.f32 %v1438, %v1438
        %v1440 = vmin.f32 16.0, %v1439
        %v1441 = vmul.f32 %v1440, 2.1237322e-06
        %v1442 = vadd.f32 %v1441, 0.00028619796
        %v1443 = vmul.f32 %v1440, %v1442
        %v1444 = vadd.f32 %v1443, 0.0036580483
        %v1445 = vmul.f32 %v1440, %v1444
        %v1446 = vadd.f32 %v1445, 0.05243302
        %v1447 = vmul.f32 %v1440, %v1446
        %v1448 = vadd.f32 %v1447, 0.18741608
        %v1449 = vmul.f32 %v1440, %v1448
        %v1450 = vadd.f32 %v1449, 1.1283791
        %v1451 = vmul.f32 %v1438, %v1450
        %v1452 = vmul.f32 %v1440, 3.8918573e-05
        %v1453 = vadd.f32 %v1452, 0.001143296
        %v1454 = vmul.f32 %v1440, %v1453
        %v1455 = vadd.f32 %v1454, 0.014752088
        %v1456 = vmul.f32 %v1440, %v1455
        %v1457 = vadd.f32 %v1456, 0.112945676
        %v1458 = vmul.f32 %v1440, %v1457
        %v1459 = vadd.f32 %v1458, 0.4994258
        %v1460 = vmul.f32 %v1440, %v1459
        %v1461 = vadd.f32 %v1460, 1.0
        %v1462 = vrcp.pop %v1461
        %v1463 = vmul.f32 %v1461, %v1462
        %v1464 = vsub.f32 1.0, %v1463
        %v1465 = vmul.f32 %v1462, %v1464
        %v1466 = vadd.f32 %v1462, %v1465
        %vm1467 = vweird.f32 %v1461
        %vm1468 = vweird.f32 %v1462
        %vm1469 = vmor %vm1467, %vm1468
        %v1470 = vsel %vm1469, %v1462, %v1466
        %v1471 = vand.u32 2147483647, %v1461
        %vm1472 = vcmp.eq.f32.partialorder %v1471, 8.507059e+37
        %v1473 = vand.u32 %v1461, 2147483648
        %v1474 = vor.u32 1.1754944e-38, %v1473
        %v1475 = vsel %vm1472, %v1474, %v1470
        %v1476 = vmul.f32 %v1451, %v1475
        %v1477 = vmin.f32 %v1476, 1.0
        %v1478 = vmax.f32 %v1477, -1.0
        %v1479 = vadd.f32 %v1478, 1.0
        %v1480 = vmul.f32 %v1437, %v1479
        %v1481 = vpack.c.bf16 %v1480, %v1480
        %v1482 = vld [vmem:[%s10] sm:$0xf]
        %v1483 = vld [vmem:[%s10 + $0x4] sm:$0xf]
        %v1484 = vld [vmem:[%s10 + $0x8] sm:$0xf]
        %v1485 = vld [vmem:[%s10 + $0xc] sm:$0xf]
        %v1486 = vld [vmem:[%s10 + $0x10] sm:$0xf]
        %v1487 = vld [vmem:[%s10 + $0x14] sm:$0xf]
        %v1488 = vld [vmem:[%s10 + $0x18] sm:$0xf]
        %v1489 = vld [vmem:[%s10 + $0x1c] sm:$0xf]
        %v1490 = vld [vmem:[%s11] sm:$0x1]
        %v1492 = vperm.slane %v1490, 0
        %v1502 = vunpack.c.l.b16 %v1482
        %v1503 = vunpack.c.l.b16 %v1483
        %v1504 = vunpack.c.l.b16 %v1484
        %v1505 = vunpack.c.l.b16 %v1485
        %v1506 = vunpack.c.l.b16 %v1486
        %v1507 = vunpack.c.l.b16 %v1487
        %v1508 = vunpack.c.l.b16 %v1488
        %v1509 = vunpack.c.l.b16 %v1489
        %v1510 = vpack.c.b16 %v1503, %v1502
        %v1511 = vpack.c.b16 %v1505, %v1504
        %v1512 = vpack.c.b16 %v1507, %v1506
        %v1513 = vpack.c.b16 %v1509, %v1508
        %vm1518 = vcmask 523264
        %v1520 = vsel %vm1518, %v1481, 0
        %1522 = vmatpush.bf16.msra.mxu0 0
        %1523 = vmatpush.bf16.msra.mxu0 0
        %1524 = vmatpush.bf16.msra.mxu0 0
        %1525 = vmatpush.bf16.msra.mxu0 0
        %1526 = vmatpush.bf16.msra.mxu0 %v1513
        %1527 = vmatpush.bf16.msra.mxu0 %v1512
        %1528 = vmatpush.bf16.msra.mxu0 %v1511
        %1529 = vmatpush.bf16.msra.mxu0 %v1510
        %1530 = vmatmul.bf16.gmra.mxu0 %v1520
        %v1531 = vpop.f32.mrf.mxu0
        %v1532 = vadd.f32 %v1492, %v1531
        %v1533 = vpop.f32.mrf.mxu0
        %1534 = vdwg.mxu0
        %v1535 = vadd.f32 %v1532, %v1399
        %v1536 = vsel %vm1344, %v1535, 0.0
        %1537 = vadd.xlane.f32.xlu0 %v1536
        %v1538 = vpop.xlane.xlu0 %1537
        %v1539 = vmul.f32 %v1538, %v1370
        %v1540 = vsub.f32 %v1535, %v1539
        %v1541 = vmul.f32 %v1540, %v1540
        %v1542 = vsel %vm1344, %v1541, 0.0
        %1543 = vadd.xlane.f32.xlu0 %v1542
        %v1544 = vpop.xlane.xlu0 %1543
        %v1545 = vmul.f32 %v1544, %v1370
        %v1546 = vadd.f32 %v1545, 1e-12
        %v1547 = vrsqrt.pop %v1546
        %v1548 = vmul.f32 %v1547, %v1546
        %v1549 = vmul.f32 %v1548, %v1547
        %v1550 = vmul.f32 0.5, %v1549
        %v1551 = vsub.f32 1.5, %v1550
        %v1552 = vmul.f32 %v1547, %v1551
        %vm1553 = vweird.f32 %v1546
        %vm1554 = vweird.f32 %v1547
        %vm1555 = vmor %vm1553, %vm1554
        %v1556 = vsel %vm1555, %v1547, %v1552
        %v1557 = vmul.f32 %v1540, %v1556
        %v1558 = vld [vmem:[%s12] sm:$0x1]
        %v1560 = vperm.slane %v1558, 0
        %v1562 = vmul.f32 %v1557, %v1560
        %v1563 = vld [vmem:[%s13] sm:$0x1]
        %v1565 = vperm.slane %v1563, 0
        %v1567 = vadd.f32 %v1562, %v1565
        %1568 = vst.msk [vmem:[%s524] sm:$0xff] %vm1344, %v1567
        %s1569 = sand.u32 %s358, 1
        %s1570 = scalar_lea.sflag [#allocation7], %s1569
        %s1571 = sand.u32 %s358, 1
        %s1572 = smul.addr %s1571, 8
        %s1573 = scalar_lea.vmem [#allocation10], %s1572
        // Predicated region
        $region89: #{tpu_custom_call.1} parent=75 // pred_check
          %p1574 = pneg %p368
        $region90: #{tpu_custom_call.1} parent=75 // pred_check_branch
          %1576 = sbr.rel (%p1574) target = $region92
        $region91: #{tpu_custom_call.1} parent=75 // pred_region
          %1578 = vsyncadd %s1570, 0
          %s1579 = sadd.s32 %s37, %s36
          %s1580 = smul.addr %s1579, 8
          %s1581 = scalar_lea.hbm %s14, %s1580
          %s1583 = sshll.u32 %s1573, 4
          %s1584 = int_to_ptr.vmem [resolvable:$true] %s1583
          %s1585 = sshll.u32 %s1581, 4
          %s1586 = int_to_ptr.hbm [resolvable:$true] %s1585
          %1588 = dma.vmem_to_hbm [thread:$0]  %s1584, 128, %s1586, %s1570
        $region92: #{tpu_custom_call.1} parent=75 // pred_fallthru
          _
      $region76: #{tpu_custom_call.1} parent=5 // pred_fallthru
        _
      %p1589 = scmp.le.s32.totalorder 2, %s27
      // Predicated region
      $region93: #{tpu_custom_call.1} parent=5 // pred_check
        %p1590 = pneg %p1589
      $region94: #{tpu_custom_call.1} parent=5 // pred_check_branch
        %1592 = sbr.rel (%p1590) target = $region96
      $region95: #{tpu_custom_call.1} parent=5 // pred_region
        %s1593 = ssub.s32 %s27, 2
        // Predicated region
        $region97: #{tpu_custom_call.1} parent=95 // pred_check
          %p1594 = pneg %p374
        $region98: #{tpu_custom_call.1} parent=95 // pred_check_branch
          %1596 = sbr.rel (%p1594) target = $region100
        $region99: #{tpu_custom_call.1} parent=95 // pred_region
          %s1597 = sand.u32 %s359, 1
          %s1598 = scalar_lea.sflag [#allocation7], %s1597
          %s1599 = sand.u32 %s359, 1
          %s1600 = smul.addr %s1599, 8
          %s1601 = scalar_lea.vmem [#allocation10], %s1600
          %1603 = dma.done %s1598, 128
        $region100: #{tpu_custom_call.1} parent=95 // pred_fallthru
          _
      $region96: #{tpu_custom_call.1} parent=5 // pred_fallthru
        _
    $region6: #{tpu_custom_call.1} parent=1 // loop_footer
      %s31 = sadd.s32 1, %s27
    $region7: #{tpu_custom_call.1} parent=1 // loop_footer_branch
      %26 = sbr.rel target = $region3
    $region8: #{tpu_custom_call.1} parent=1 // loop_exit
      _
    %1604 = vsyncpa [#allocation6], 1
    %s1605 = scalar_lea.sflag [#allocation6], 1
    %1606 = vsyncpa %s1605, 1
    %1607 = vsyncpa [#allocation9], 1
    %1608 = vsyncpa [#allocation7], 1
    %s1609 = scalar_lea.sflag [#allocation7], 1
    %1610 = vsyncpa %s1609, 1

</llo_original>
